<compile_context>
chip_gen: v7x
topology: tpu7x:2x2x1
jax: 0.10.0
libtpu: 0.0.40
codegen_flags: <defaults>
</compile_context>

<pallas_src>
import jax
import jax.numpy as jnp
from jax.experimental import pallas as pl
from jax.experimental.pallas import tpu as pltpu

BN_EPS = 1e-5
TB_MAX = 1024  # max batch rows per grid step (keeps v7x 64 MiB VMEM comfortable)


def _cdiv(a, b):
    return -(-a // b)


def _round_up(a, m):
    return ((a + m - 1) // m) * m


# --------------------------------------------------------------------------
# Kernel
# --------------------------------------------------------------------------
def _ae_kernel(x_ref, w1, b1, w2, b2, w3, b3, w4, b4, w5, b5, w6, b6, out_ref):
    """One batch tile of the full (BN-folded) autoencoder forward."""

    def linear(h, w_ref, b_ref):
        # bf16 operands on the MXU (no-op cast when h is already bf16),
        # f32 accumulation via preferred_element_type, f32 bias add.
        return jnp.dot(h.astype(jnp.bfloat16), w_ref[...],
                       preferred_element_type=jnp.float32) + b_ref[...]

    h = x_ref[...]                                   # (TB, 932) bf16 (or caller dtype)
    # ----- encoder (BN folded into w1/b1 and w2/b2) -----
    h = jnp.maximum(linear(h, w1, b1), 0.0)          # Linear+BN+ReLU
    # Dropout(p=0.3) is identity in eval mode.
    h = jnp.maximum(linear(h, w2, b2), 0.0)          # Linear+BN+ReLU
    h = linear(h, w3, b3)                            # bottleneck (encoded)
    # ----- decoder (BN after ReLU folded forward into w5/b5 and w6/b6) -----
    h = jnp.maximum(linear(h, w4, b4), 0.0)          # Linear+ReLU
    h = jnp.maximum(linear(h, w5, b5), 0.0)          # (BN4·)Linear+ReLU
    out_ref[...] = linear(h, w6, b6).astype(out_ref.dtype)   # (BN5·)Linear


# --------------------------------------------------------------------------
# Wrapper
# --------------------------------------------------------------------------
@jax.jit
def mordred_ae_forward(x, *kparams):
    """x: (N, 932), any float dtype (bf16 preferred: it is streamed as-is,
    the kernel only needs bf16 MXU operands).  kparams: folded+padded kernel
    params from fold_and_pad_params().  Returns (N, 932) bfloat16."""
    n, d_in = x.shape

    # Batch tile: aim for >= 2 grid steps so both v7x TensorCores get work,
    # cap at TB_MAX rows, round to 16 rows (bf16 sublane packing).  If the
    # whole batch fits in one tile, use a full-extent block (exempt from the
    # 8-row divisibility rule); otherwise the cdiv grid handles the partial
    # trailing block with masked edge stores — no batch over-padding.
    tb = min(TB_MAX, _round_up(_cdiv(max(n, 1), 2), 16))
    if tb >= n:
        tb = n
    grid = (_cdiv(n, tb),)

    # Activation blocks keep the native 932-wide last dim (full extent) ->
    # no wrapper-side pad/slice copies, half-width bf16 streams.
    act_in_spec = pl.BlockSpec((tb, d_in), lambda i: (i, 0))
    act_out_spec = pl.BlockSpec((tb, d_in), lambda i: (i, 0))
    # Full-extent weight/bias blocks with constant index_map: DMA'd once,
    # resident in VMEM across all grid steps (~2.3 MiB double-buffered).
    weight_spec = lambda p: pl.BlockSpec(p.shape, lambda i: (0, 0))

    out = pl.pallas_call(
        _ae_kernel,
        out_shape=jax.ShapeDtypeStruct((n, d_in), jnp.bfloat16),
        grid=grid,
        in_specs=[act_in_spec] + [weight_spec(p) for p in kparams],
        out_specs=act_out_spec,
        compiler_params=pltpu.CompilerParams(
            dimension_semantics=("parallel",),   # shard batch grid across TCs
            vmem_limit_bytes=48 << 20,           # headroom even on v7x (64 MiB)
        ),
    )(x, *kparams)
    return out


# --------------------------------------------------------------------------
# Parameters (original f32 module params + folded/padded kernel params)
# --------------------------------------------------------------------------
def make_params(key, input_dim=932, hidden=(256, 64, 32)):
    """Deterministic synthetic module parameters (Linear weights as (in, out))."""
    h0, h1, h2 = hidden
    dims = [
        (input_dim, h0), (h0, h1), (h1, h2),   # encoder linears
        (h2, h1), (h1, h0), (h0, input_dim),   # decoder linears
    ]
    keys = jax.random.split(key, 64)
    ki = iter(range(64))

    def lin(din, dout):
        w = jax.random.normal(keys[next(ki)], (din, dout), jnp.float32) * 0.05
        b = jax.random.normal(keys[next(ki)], (1, dout), jnp.float32) * 0.01
        return w, b

    def bn(d):
        g = 1.0 + 0.1 * jax.random.normal(keys[next(ki)], (1, d), jnp.float32)
        be = 0.1 * jax.random.normal(keys[next(ki)], (1, d), jnp.float32)
        m = 0.1 * jax.random.normal(keys[next(ki)], (1, d), jnp.float32)
        v = jnp.abs(1.0 + 0.1 * jax.random.normal(keys[next(ki)], (1, d), jnp.float32))
        return g, be, m, v

    w1, b1 = lin(*dims[0]); g1, be1, m1, v1 = bn(h0)
    w2, b2 = lin(*dims[1]); g2, be2, m2, v2 = bn(h1)
    w3, b3 = lin(*dims[2])
    w4, b4 = lin(*dims[3]); g4, be4, m4, v4 = bn(h1)
    w5, b5 = lin(*dims[4]); g5, be5, m5, v5 = bn(h0)
    w6, b6 = lin(*dims[5])

    return (
        w1, b1, g1, be1, m1, v1,
        w2, b2, g2, be2, m2, v2,
        w3, b3,
        w4, b4, g4, be4, m4, v4,
        w5, b5, g5, be5, m5, v5,
        w6, b6,
    )


def fold_and_pad_params(params, input_dim=932, hidden=(256, 64, 32)):
    """Fold eval-mode BatchNorms into the Linears, zero-pad only the HIDDEN
    dims to multiples of 128 (input/output dim stays 932), cast weights to
    bf16 (biases stay f32)."""
    (w1, b1, g1, be1, m1, v1,
     w2, b2, g2, be2, m2, v2,
     w3, b3,
     w4, b4, g4, be4, m4, v4,
     w5, b5, g5, be5, m5, v5,
     w6, b6) = params

    def scale_shift(g, be, m, v):
        s = g / jnp.sqrt(v + BN_EPS)          # (1, F)
        t = be - m * s                        # (1, F)
        return s, t

    # Encoder: BN directly follows the Linear -> fold backward into W, b.
    s1, t1 = scale_shift(g1, be1, m1, v1)
    w1f, b1f = w1 * s1, b1 * s1 + t1
    s2, t2 = scale_shift(g2, be2, m2, v2)
    w2f, b2f = w2 * s2, b2 * s2 + t2
    # Decoder: BN follows a ReLU -> fold forward into the NEXT Linear:
    #   (relu(h)*s + t) @ W + b = relu(h) @ (diag(s) W) + (t @ W + b)
    s4, t4 = scale_shift(g4, be4, m4, v4)
    w5f = s4.reshape(-1, 1) * w5
    b5f = t4 @ w5 + b5
    s5, t5 = scale_shift(g5, be5, m5, v5)
    w6f = s5.reshape(-1, 1) * w6
    b6f = t5 @ w6 + b6

    H0, H1, H2 = (_round_up(h, 128) for h in hidden)   # 256, 128, 128

    def pad_to(a, shape):
        out = jnp.zeros(shape, a.dtype)
        return out.at[tuple(slice(0, s) for s in a.shape)].set(a)

    w_list = [(w1f, (input_dim, H0)), (w2f, (H0, H1)), (w3, (H1, H2)),
              (w4, (H2, H1)), (w5f, (H1, H0)), (w6f, (H0, input_dim))]
    b_list = [(b1f, (1, H0)), (b2f, (1, H1)), (b3, (1, H2)),
              (b4, (1, H1)), (b5f, (1, H0)), (b6f, (1, input_dim))]

    ws = [pad_to(w, s).astype(jnp.bfloat16) for w, s in w_list]
    bs = [pad_to(b, s).astype(jnp.float32) for b, s in b_list]
    return tuple(p for pair in zip(ws, bs) for p in pair)


# --------------------------------------------------------------------------
# Plain-JAX reference (original module semantics, f32, unfolded BN)
# --------------------------------------------------------------------------
def reference_forward(x, params):
    (w1, b1, g1, be1, m1, v1,
     w2, b2, g2, be2, m2, v2,
     w3, b3,
     w4, b4, g4, be4, m4, v4,
     w5, b5, g5, be5, m5, v5,
     w6, b6) = params

    def bn(h, g, be, m, v):
        return (h - m) * (g / jnp.sqrt(v + BN_EPS)) + be

    h = x @ w1 + b1
    h = jnp.maximum(bn(h, g1, be1, m1, v1), 0.0)
    h = h @ w2 + b2
    h = jnp.maximum(bn(h, g2, be2, m2, v2), 0.0)
    enc = h @ w3 + b3
    h = jnp.maximum(enc @ w4 + b4, 0.0)
    h = bn(h, g4, be4, m4, v4)
    h = jnp.maximum(h @ w5 + b5, 0.0)
    h = bn(h, g5, be5, m5, v5)
    return h @ w6 + b6


if __name__ == "__main__":
    INPUT, HIDDEN, BATCH = 932, (256, 64, 32), 8

    root = jax.random.PRNGKey(0)
    k_x, k_p = jax.random.split(root)
    x_f32 = jax.random.normal(k_x, (BATCH, INPUT), jnp.float32)
    x = x_f32.astype(jnp.bfloat16)          # kernel streams bf16 activations
    params = make_params(k_p, INPUT, HIDDEN)
    kparams = fold_and_pad_params(params, INPUT, HIDDEN)

    out = jax.block_until_ready(mordred_ae_forward(x, *kparams))

    # Reference sees the same (bf16-quantized) input so only weight/MXU/output
    # rounding counts against the tolerance.
    ref = reference_forward(x.astype(jnp.float32), params)
    assert out.shape == (BATCH, INPUT), out.shape
    assert out.dtype == jnp.bfloat16, out.dtype
    out_f32 = out.astype(jnp.float32)
    # bf16 weights + bf16 MXU operands + bf16 output store vs. pure-f32 ref.
    assert jnp.allclose(out_f32, ref, atol=6e-2, rtol=6e-2), (
        float(jnp.max(jnp.abs(out_f32 - ref)))
    )
    print("KERNEL_OK")
</pallas_src>

<mosaic_0001>
module attributes {stable_mosaic.version = 11 : i64} {
  func.func @_ae_kernel(%arg0: i32, %arg1: memref<8x932xbf16, #tpu.memory_space<vmem>>, %arg2: memref<932x256xbf16, #tpu.memory_space<vmem>>, %arg3: memref<1x256xf32, #tpu.memory_space<vmem>>, %arg4: memref<256x128xbf16, #tpu.memory_space<vmem>>, %arg5: memref<1x128xf32, #tpu.memory_space<vmem>>, %arg6: memref<128x128xbf16, #tpu.memory_space<vmem>>, %arg7: memref<1x128xf32, #tpu.memory_space<vmem>>, %arg8: memref<128x128xbf16, #tpu.memory_space<vmem>>, %arg9: memref<1x128xf32, #tpu.memory_space<vmem>>, %arg10: memref<128x256xbf16, #tpu.memory_space<vmem>>, %arg11: memref<1x256xf32, #tpu.memory_space<vmem>>, %arg12: memref<256x932xbf16, #tpu.memory_space<vmem>>, %arg13: memref<1x932xf32, #tpu.memory_space<vmem>>, %arg14: memref<8x932xbf16, #tpu.memory_space<vmem>>) attributes {dimension_semantics = [#tpu.dimension_semantics<parallel>], iteration_bounds = array<i64: 1>, scalar_prefetch = 0 : i64, scratch_operands = 0 : i64, tpu.core_type = #tpu.core_type<tc>, window_params = [{transform_indices = @transform_0, window_bounds = array<i64: 8, 932>}, {pipeline_mode = #tpu.pipeline_mode<synchronous>, transform_indices = @transform_1, window_bounds = array<i64: 932, 256>}, {pipeline_mode = #tpu.pipeline_mode<synchronous>, transform_indices = @transform_2, window_bounds = array<i64: 1, 256>}, {pipeline_mode = #tpu.pipeline_mode<synchronous>, transform_indices = @transform_3, window_bounds = array<i64: 256, 128>}, {pipeline_mode = #tpu.pipeline_mode<synchronous>, transform_indices = @transform_4, window_bounds = array<i64: 1, 128>}, {pipeline_mode = #tpu.pipeline_mode<synchronous>, transform_indices = @transform_5, window_bounds = array<i64: 128, 128>}, {pipeline_mode = #tpu.pipeline_mode<synchronous>, transform_indices = @transform_6, window_bounds = array<i64: 1, 128>}, {pipeline_mode = #tpu.pipeline_mode<synchronous>, transform_indices = @transform_7, window_bounds = array<i64: 128, 128>}, {pipeline_mode = #tpu.pipeline_mode<synchronous>, transform_indices = @transform_8, window_bounds = array<i64: 1, 128>}, {pipeline_mode = #tpu.pipeline_mode<synchronous>, transform_indices = @transform_9, window_bounds = array<i64: 128, 256>}, {pipeline_mode = #tpu.pipeline_mode<synchronous>, transform_indices = @transform_10, window_bounds = array<i64: 1, 256>}, {pipeline_mode = #tpu.pipeline_mode<synchronous>, transform_indices = @transform_11, window_bounds = array<i64: 256, 932>}, {pipeline_mode = #tpu.pipeline_mode<synchronous>, transform_indices = @transform_12, window_bounds = array<i64: 1, 932>}, {transform_indices = @transform_13, window_bounds = array<i64: 8, 932>}]} {
    %c0 = arith.constant 0 : index
    %c0_0 = arith.constant 0 : index
    %0 = vector.load %arg1[%c0, %c0_0] : memref<8x932xbf16, #tpu.memory_space<vmem>>, vector<8x932xbf16>
    %c0_1 = arith.constant 0 : index
    %c0_2 = arith.constant 0 : index
    %1 = vector.load %arg2[%c0_1, %c0_2] : memref<932x256xbf16, #tpu.memory_space<vmem>>, vector<932x256xbf16>
    %cst = arith.constant dense<0.000000e+00> : vector<8x256xf32>
    %2 = tpu.matmul %0, %1, %cst {dimension_numbers = #tpu.dot_dimension_numbers<[1], [0], [0], [1], [0, 0, 1, 1], [], []>} : vector<8x932xbf16>, vector<932x256xbf16>, vector<8x256xf32> -> vector<8x256xf32>
    %c0_3 = arith.constant 0 : index
    %c0_4 = arith.constant 0 : index
    %3 = vector.load %arg3[%c0_3, %c0_4] : memref<1x256xf32, #tpu.memory_space<vmem>>, vector<1x256xf32>
    %4 = vector.broadcast %3 : vector<1x256xf32> to vector<8x256xf32>
    %5 = arith.addf %2, %4 : vector<8x256xf32>
    %cst_5 = arith.constant 0.000000e+00 : f32
    %6 = vector.broadcast %cst_5 : f32 to vector<8x256xf32>
    %7 = arith.maximumf %5, %6 : vector<8x256xf32>
    %8 = arith.truncf %7 : vector<8x256xf32> to vector<8x256xbf16>
    %c0_6 = arith.constant 0 : index
    %c0_7 = arith.constant 0 : index
    %9 = vector.load %arg4[%c0_6, %c0_7] : memref<256x128xbf16, #tpu.memory_space<vmem>>, vector<256x128xbf16>
    %cst_8 = arith.constant dense<0.000000e+00> : vector<8x128xf32>
    %10 = tpu.matmul %8, %9, %cst_8 {dimension_numbers = #tpu.dot_dimension_numbers<[1], [0], [0], [1], [0, 0, 1, 1], [], []>} : vector<8x256xbf16>, vector<256x128xbf16>, vector<8x128xf32> -> vector<8x128xf32>
    %c0_9 = arith.constant 0 : index
    %c0_10 = arith.constant 0 : index
    %11 = vector.load %arg5[%c0_9, %c0_10] : memref<1x128xf32, #tpu.memory_space<vmem>>, vector<1x128xf32>
    %12 = vector.broadcast %11 : vector<1x128xf32> to vector<8x128xf32>
    %13 = arith.addf %10, %12 : vector<8x128xf32>
    %cst_11 = arith.constant 0.000000e+00 : f32
    %14 = vector.broadcast %cst_11 : f32 to vector<8x128xf32>
    %15 = arith.maximumf %13, %14 : vector<8x128xf32>
    %16 = arith.truncf %15 : vector<8x128xf32> to vector<8x128xbf16>
    %c0_12 = arith.constant 0 : index
    %c0_13 = arith.constant 0 : index
    %17 = vector.load %arg6[%c0_12, %c0_13] : memref<128x128xbf16, #tpu.memory_space<vmem>>, vector<128x128xbf16>
    %cst_14 = arith.constant dense<0.000000e+00> : vector<8x128xf32>
    %18 = tpu.matmul %16, %17, %cst_14 {dimension_numbers = #tpu.dot_dimension_numbers<[1], [0], [0], [1], [0, 0, 1, 1], [], []>} : vector<8x128xbf16>, vector<128x128xbf16>, vector<8x128xf32> -> vector<8x128xf32>
    %c0_15 = arith.constant 0 : index
    %c0_16 = arith.constant 0 : index
    %19 = vector.load %arg7[%c0_15, %c0_16] : memref<1x128xf32, #tpu.memory_space<vmem>>, vector<1x128xf32>
    %20 = vector.broadcast %19 : vector<1x128xf32> to vector<8x128xf32>
    %21 = arith.addf %18, %20 : vector<8x128xf32>
    %22 = arith.truncf %21 : vector<8x128xf32> to vector<8x128xbf16>
    %c0_17 = arith.constant 0 : index
    %c0_18 = arith.constant 0 : index
    %23 = vector.load %arg8[%c0_17, %c0_18] : memref<128x128xbf16, #tpu.memory_space<vmem>>, vector<128x128xbf16>
    %cst_19 = arith.constant dense<0.000000e+00> : vector<8x128xf32>
    %24 = tpu.matmul %22, %23, %cst_19 {dimension_numbers = #tpu.dot_dimension_numbers<[1], [0], [0], [1], [0, 0, 1, 1], [], []>} : vector<8x128xbf16>, vector<128x128xbf16>, vector<8x128xf32> -> vector<8x128xf32>
    %c0_20 = arith.constant 0 : index
    %c0_21 = arith.constant 0 : index
    %25 = vector.load %arg9[%c0_20, %c0_21] : memref<1x128xf32, #tpu.memory_space<vmem>>, vector<1x128xf32>
    %26 = vector.broadcast %25 : vector<1x128xf32> to vector<8x128xf32>
    %27 = arith.addf %24, %26 : vector<8x128xf32>
    %cst_22 = arith.constant 0.000000e+00 : f32
    %28 = vector.broadcast %cst_22 : f32 to vector<8x128xf32>
    %29 = arith.maximumf %27, %28 : vector<8x128xf32>
    %30 = arith.truncf %29 : vector<8x128xf32> to vector<8x128xbf16>
    %c0_23 = arith.constant 0 : index
    %c0_24 = arith.constant 0 : index
    %31 = vector.load %arg10[%c0_23, %c0_24] : memref<128x256xbf16, #tpu.memory_space<vmem>>, vector<128x256xbf16>
    %cst_25 = arith.constant dense<0.000000e+00> : vector<8x256xf32>
    %32 = tpu.matmul %30, %31, %cst_25 {dimension_numbers = #tpu.dot_dimension_numbers<[1], [0], [0], [1], [0, 0, 1, 1], [], []>} : vector<8x128xbf16>, vector<128x256xbf16>, vector<8x256xf32> -> vector<8x256xf32>
    %c0_26 = arith.constant 0 : index
    %c0_27 = arith.constant 0 : index
    %33 = vector.load %arg11[%c0_26, %c0_27] : memref<1x256xf32, #tpu.memory_space<vmem>>, vector<1x256xf32>
    %34 = vector.broadcast %33 : vector<1x256xf32> to vector<8x256xf32>
    %35 = arith.addf %32, %34 : vector<8x256xf32>
    %cst_28 = arith.constant 0.000000e+00 : f32
    %36 = vector.broadcast %cst_28 : f32 to vector<8x256xf32>
    %37 = arith.maximumf %35, %36 : vector<8x256xf32>
    %38 = arith.truncf %37 : vector<8x256xf32> to vector<8x256xbf16>
    %c0_29 = arith.constant 0 : index
    %c0_30 = arith.constant 0 : index
    %39 = vector.load %arg12[%c0_29, %c0_30] : memref<256x932xbf16, #tpu.memory_space<vmem>>, vector<256x932xbf16>
    %cst_31 = arith.constant dense<0.000000e+00> : vector<8x932xf32>
    %40 = tpu.matmul %38, %39, %cst_31 {dimension_numbers = #tpu.dot_dimension_numbers<[1], [0], [0], [1], [0, 0, 1, 1], [], []>} : vector<8x256xbf16>, vector<256x932xbf16>, vector<8x932xf32> -> vector<8x932xf32>
    %c0_32 = arith.constant 0 : index
    %c0_33 = arith.constant 0 : index
    %41 = vector.load %arg13[%c0_32, %c0_33] : memref<1x932xf32, #tpu.memory_space<vmem>>, vector<1x932xf32>
    %42 = vector.broadcast %41 : vector<1x932xf32> to vector<8x932xf32>
    %43 = arith.addf %40, %42 : vector<8x932xf32>
    %44 = arith.truncf %43 : vector<8x932xf32> to vector<8x932xbf16>
    %c0_34 = arith.constant 0 : index
    %c0_35 = arith.constant 0 : index
    %45 = vector.load %arg14[%c0_34, %c0_35] : memref<8x932xbf16, #tpu.memory_space<vmem>>, vector<8x932xbf16>
    tpu.vector_store %arg14[%c0_34, %c0_35], %44 {strides = array<i32>} : memref<8x932xbf16, #tpu.memory_space<vmem>>, vector<8x932xbf16>,
    return
  }
  func.func @transform_0(%arg0: i32) -> (i32, i32) {
    %c0_i32 = arith.constant 0 : i32
    %c0_i32_0 = arith.constant 0 : i32
    return %arg0, %c0_i32 : i32, i32
  }
  func.func @transform_1(%arg0: i32) -> (i32, i32) {
    %c0_i32 = arith.constant 0 : i32
    %c0_i32_0 = arith.constant 0 : i32
    %c0_i32_1 = arith.constant 0 : i32
    return %c0_i32, %c0_i32_0 : i32, i32
  }
  func.func @transform_2(%arg0: i32) -> (i32, i32) {
    %c0_i32 = arith.constant 0 : i32
    %c0_i32_0 = arith.constant 0 : i32
    %c0_i32_1 = arith.constant 0 : i32
    return %c0_i32, %c0_i32_0 : i32, i32
  }
  func.func @transform_3(%arg0: i32) -> (i32, i32) {
    %c0_i32 = arith.constant 0 : i32
    %c0_i32_0 = arith.constant 0 : i32
    %c0_i32_1 = arith.constant 0 : i32
    return %c0_i32, %c0_i32_0 : i32, i32
  }
  func.func @transform_4(%arg0: i32) -> (i32, i32) {
    %c0_i32 = arith.constant 0 : i32
    %c0_i32_0 = arith.constant 0 : i32
    %c0_i32_1 = arith.constant 0 : i32
    return %c0_i32, %c0_i32_0 : i32, i32
  }
  func.func @transform_5(%arg0: i32) -> (i32, i32) {
    %c0_i32 = arith.constant 0 : i32
    %c0_i32_0 = arith.constant 0 : i32
    %c0_i32_1 = arith.constant 0 : i32
    return %c0_i32, %c0_i32_0 : i32, i32
  }
  func.func @transform_6(%arg0: i32) -> (i32, i32) {
    %c0_i32 = arith.constant 0 : i32
    %c0_i32_0 = arith.constant 0 : i32
    %c0_i32_1 = arith.constant 0 : i32
    return %c0_i32, %c0_i32_0 : i32, i32
  }
  func.func @transform_7(%arg0: i32) -> (i32, i32) {
    %c0_i32 = arith.constant 0 : i32
    %c0_i32_0 = arith.constant 0 : i32
    %c0_i32_1 = arith.constant 0 : i32
    return %c0_i32, %c0_i32_0 : i32, i32
  }
  func.func @transform_8(%arg0: i32) -> (i32, i32) {
    %c0_i32 = arith.constant 0 : i32
    %c0_i32_0 = arith.constant 0 : i32
    %c0_i32_1 = arith.constant 0 : i32
    return %c0_i32, %c0_i32_0 : i32, i32
  }
  func.func @transform_9(%arg0: i32) -> (i32, i32) {
    %c0_i32 = arith.constant 0 : i32
    %c0_i32_0 = arith.constant 0 : i32
    %c0_i32_1 = arith.constant 0 : i32
    return %c0_i32, %c0_i32_0 : i32, i32
  }
  func.func @transform_10(%arg0: i32) -> (i32, i32) {
    %c0_i32 = arith.constant 0 : i32
    %c0_i32_0 = arith.constant 0 : i32
    %c0_i32_1 = arith.constant 0 : i32
    return %c0_i32, %c0_i32_0 : i32, i32
  }
  func.func @transform_11(%arg0: i32) -> (i32, i32) {
    %c0_i32 = arith.constant 0 : i32
    %c0_i32_0 = arith.constant 0 : i32
    %c0_i32_1 = arith.constant 0 : i32
    return %c0_i32, %c0_i32_0 : i32, i32
  }
  func.func @transform_12(%arg0: i32) -> (i32, i32) {
    %c0_i32 = arith.constant 0 : i32
    %c0_i32_0 = arith.constant 0 : i32
    %c0_i32_1 = arith.constant 0 : i32
    return %c0_i32, %c0_i32_0 : i32, i32
  }
  func.func @transform_13(%arg0: i32) -> (i32, i32) {
    %c0_i32 = arith.constant 0 : i32
    %c0_i32_0 = arith.constant 0 : i32
    return %arg0, %c0_i32 : i32, i32
  }
}

</mosaic_0001>

<llo_original>
// kernel: mordred_ae_forward.1
$region0: #{mordred_ae_forward.1}
  #allocation0 [shape = 'u32[]', space=smem, size = 0x4, offset = 0x4, fixed_abs, tag = 'smem constant byte address 0x4 - core index']
  #allocation1 [shape = 'u32[144,128]{1,0:T(1,128)}', space=vmem, size = 0x12000, scoped, tag = 'internal scratch']
  %s0 = inlined_call_operand.vmem [shape: bf16[8,932], index: 0, kind: input, shape index: {}]
  %s1 = inlined_call_operand.vmem [shape: bf16[932,256], index: 1, kind: input, shape index: {}]
  %s2 = inlined_call_operand.vmem [shape: f32[1,256], index: 2, kind: input, shape index: {}]
  %s3 = inlined_call_operand.vmem [shape: bf16[256,128], index: 3, kind: input, shape index: {}]
  %s4 = inlined_call_operand.vmem [shape: f32[1,128], index: 4, kind: input, shape index: {}]
  %s5 = inlined_call_operand.vmem [shape: bf16[128,128], index: 5, kind: input, shape index: {}]
  %s6 = inlined_call_operand.vmem [shape: f32[1,128], index: 6, kind: input, shape index: {}]
  %s7 = inlined_call_operand.vmem [shape: bf16[128,128], index: 7, kind: input, shape index: {}]
  %s8 = inlined_call_operand.vmem [shape: f32[1,128], index: 8, kind: input, shape index: {}]
  %s9 = inlined_call_operand.vmem [shape: bf16[128,256], index: 9, kind: input, shape index: {}]
  %s10 = inlined_call_operand.vmem [shape: f32[1,256], index: 10, kind: input, shape index: {}]
  %s11 = inlined_call_operand.vmem [shape: bf16[256,932], index: 11, kind: input, shape index: {}]
  %s12 = inlined_call_operand.vmem [shape: f32[1,932], index: 12, kind: input, shape index: {}]
  %s13 = inlined_call_operand.hbm [shape: bf16[8,932], index: 13, kind: output, shape index: {}]
  %s14 = sld [smem:[#allocation0]]
  $region62: #{mordred_ae_forward.1} parent=0
    _
  %s16 = ssub.s32 1, %s14
  %s17 = scalar_select 0, %s16, %s14
  $region1: #{mordred_ae_forward.1} parent=0
    #allocation2 [shape = 'u8[16384]{0}', space=vmem, size = 0x4000, scoped, tag = 'output window, operand 0, single buffered']
    #allocation3 [shape = 's32[1]{0}', space=sflag, size = 0x4, scoped, tag = 'scoped memory for mordred_ae_forward.1']
    %18 = vsyncpa [#allocation3], 0
    // Predicated region
    $region2: #{mordred_ae_forward.1} parent=1 // pred_check
      _
    $region3: #{mordred_ae_forward.1} parent=1 // pred_check_branch
      %20 = sbr.rel (0) target = $region5
    $region4: #{mordred_ae_forward.1} parent=1 // pred_region
      _
    $region5: #{mordred_ae_forward.1} parent=1 // pred_fallthru
      _
    // Predicated region
    $region6: #{mordred_ae_forward.1} parent=1 // pred_check
      _
    $region7: #{mordred_ae_forward.1} parent=1 // pred_check_branch
      %22 = sbr.rel (0) target = $region9
    $region8: #{mordred_ae_forward.1} parent=1 // pred_region
      _
    $region9: #{mordred_ae_forward.1} parent=1 // pred_fallthru
      _
    // Predicated region
    $region10: #{mordred_ae_forward.1} parent=1 // pred_check
      _
    $region11: #{mordred_ae_forward.1} parent=1 // pred_check_branch
      %24 = sbr.rel (0) target = $region13
    $region12: #{mordred_ae_forward.1} parent=1 // pred_region
      _
    $region13: #{mordred_ae_forward.1} parent=1 // pred_fallthru
      _
    // Predicated region
    $region14: #{mordred_ae_forward.1} parent=1 // pred_check
      _
    $region15: #{mordred_ae_forward.1} parent=1 // pred_check_branch
      %26 = sbr.rel (0) target = $region17
    $region16: #{mordred_ae_forward.1} parent=1 // pred_region
      _
    $region17: #{mordred_ae_forward.1} parent=1 // pred_fallthru
      _
    // Predicated region
    $region18: #{mordred_ae_forward.1} parent=1 // pred_check
      _
    $region19: #{mordred_ae_forward.1} parent=1 // pred_check_branch
      %28 = sbr.rel (0) target = $region21
    $region20: #{mordred_ae_forward.1} parent=1 // pred_region
      _
    $region21: #{mordred_ae_forward.1} parent=1 // pred_fallthru
      _
    // Predicated region
    $region22: #{mordred_ae_forward.1} parent=1 // pred_check
      _
    $region23: #{mordred_ae_forward.1} parent=1 // pred_check_branch
      %30 = sbr.rel (0) target = $region25
    $region24: #{mordred_ae_forward.1} parent=1 // pred_region
      _
    $region25: #{mordred_ae_forward.1} parent=1 // pred_fallthru
      _
    // Predicated region
    $region26: #{mordred_ae_forward.1} parent=1 // pred_check
      _
    $region27: #{mordred_ae_forward.1} parent=1 // pred_check_branch
      %32 = sbr.rel (0) target = $region29
    $region28: #{mordred_ae_forward.1} parent=1 // pred_region
      _
    $region29: #{mordred_ae_forward.1} parent=1 // pred_fallthru
      _
    // Predicated region
    $region30: #{mordred_ae_forward.1} parent=1 // pred_check
      _
    $region31: #{mordred_ae_forward.1} parent=1 // pred_check_branch
      %34 = sbr.rel (0) target = $region33
    $region32: #{mordred_ae_forward.1} parent=1 // pred_region
      _
    $region33: #{mordred_ae_forward.1} parent=1 // pred_fallthru
      _
    // Predicated region
    $region34: #{mordred_ae_forward.1} parent=1 // pred_check
      _
    $region35: #{mordred_ae_forward.1} parent=1 // pred_check_branch
      %36 = sbr.rel (0) target = $region37
    $region36: #{mordred_ae_forward.1} parent=1 // pred_region
      _
    $region37: #{mordred_ae_forward.1} parent=1 // pred_fallthru
      _
    // Predicated region
    $region38: #{mordred_ae_forward.1} parent=1 // pred_check
      _
    $region39: #{mordred_ae_forward.1} parent=1 // pred_check_branch
      %38 = sbr.rel (0) target = $region41
    $region40: #{mordred_ae_forward.1} parent=1 // pred_region
      _
    $region41: #{mordred_ae_forward.1} parent=1 // pred_fallthru
      _
    // Predicated region
    $region42: #{mordred_ae_forward.1} parent=1 // pred_check
      _
    $region43: #{mordred_ae_forward.1} parent=1 // pred_check_branch
      %40 = sbr.rel (0) target = $region45
    $region44: #{mordred_ae_forward.1} parent=1 // pred_region
      _
    $region45: #{mordred_ae_forward.1} parent=1 // pred_fallthru
      _
    // Predicated region
    $region46: #{mordred_ae_forward.1} parent=1 // pred_check
      _
    $region47: #{mordred_ae_forward.1} parent=1 // pred_check_branch
      %42 = sbr.rel (0) target = $region49
    $region48: #{mordred_ae_forward.1} parent=1 // pred_region
      _
    $region49: #{mordred_ae_forward.1} parent=1 // pred_fallthru
      _
    // Predicated region
    $region50: #{mordred_ae_forward.1} parent=1 // pred_check
      _
    $region51: #{mordred_ae_forward.1} parent=1 // pred_check_branch
      %44 = sbr.rel (0) target = $region53
    $region52: #{mordred_ae_forward.1} parent=1 // pred_region
      _
    $region53: #{mordred_ae_forward.1} parent=1 // pred_fallthru
      _
    %v46 = vld [vmem:[%s0] sm:$0xff]
    %v47 = vld [vmem:[%s0 + $0x8] sm:$0xff]
    %v48 = vld [vmem:[%s0 + $0x10] sm:$0xff]
    %v49 = vld [vmem:[%s0 + $0x18] sm:$0xff]
    %v50 = vld [vmem:[%s1] sm:$0xff]
    %v51 = vld [vmem:[%s1 + $0x8] sm:$0xff]
    %v52 = vld [vmem:[%s1 + $0x10] sm:$0xff]
    %v53 = vld [vmem:[%s1 + $0x18] sm:$0xff]
    %v54 = vld [vmem:[%s1 + $0x20] sm:$0xff]
    %v55 = vld [vmem:[%s1 + $0x28] sm:$0xff]
    %v56 = vld [vmem:[%s1 + $0x30] sm:$0xff]
    %v57 = vld [vmem:[%s1 + $0x38] sm:$0xff]
    %v58 = vld [vmem:[%s1 + $0x40] sm:$0xff]
    %v59 = vld [vmem:[%s1 + $0x48] sm:$0xff]
    %v60 = vld [vmem:[%s1 + $0x50] sm:$0xff]
    %v61 = vld [vmem:[%s1 + $0x58] sm:$0xff]
    %v62 = vld [vmem:[%s1 + $0x60] sm:$0xff]
    %v63 = vld [vmem:[%s1 + $0x68] sm:$0xff]
    %v64 = vld [vmem:[%s1 + $0x70] sm:$0xff]
    %v65 = vld [vmem:[%s1 + $0x78] sm:$0xff]
    %v66 = vld [vmem:[%s1 + $0x80] sm:$0xff]
    %v67 = vld [vmem:[%s1 + $0x88] sm:$0xff]
    %v68 = vld [vmem:[%s1 + $0x90] sm:$0xff]
    %v69 = vld [vmem:[%s1 + $0x98] sm:$0xff]
    %v70 = vld [vmem:[%s1 + $0xa0] sm:$0xff]
    %v71 = vld [vmem:[%s1 + $0xa8] sm:$0xff]
    %v72 = vld [vmem:[%s1 + $0xb0] sm:$0xff]
    %v73 = vld [vmem:[%s1 + $0xb8] sm:$0xff]
    %v74 = vld [vmem:[%s1 + $0xc0] sm:$0xff]
    %v75 = vld [vmem:[%s1 + $0xc8] sm:$0xff]
    %v76 = vld [vmem:[%s1 + $0xd0] sm:$0xff]
    %v77 = vld [vmem:[%s1 + $0xd8] sm:$0xff]
    %v78 = vld [vmem:[%s1 + $0xe0] sm:$0xff]
    %v79 = vld [vmem:[%s1 + $0xe8] sm:$0xff]
    %v80 = vld [vmem:[%s1 + $0xf0] sm:$0xff]
    %v81 = vld [vmem:[%s1 + $0xf8] sm:$0xff]
    %v82 = vld [vmem:[%s1 + $0x100] sm:$0xff]
    %v83 = vld [vmem:[%s1 + $0x108] sm:$0xff]
    %v84 = vld [vmem:[%s1 + $0x110] sm:$0xff]
    %v85 = vld [vmem:[%s1 + $0x118] sm:$0xff]
    %v86 = vld [vmem:[%s1 + $0x120] sm:$0xff]
    %v87 = vld [vmem:[%s1 + $0x128] sm:$0xff]
    %v88 = vld [vmem:[%s1 + $0x130] sm:$0xff]
    %v89 = vld [vmem:[%s1 + $0x138] sm:$0xff]
    %v90 = vld [vmem:[%s1 + $0x140] sm:$0xff]
    %v91 = vld [vmem:[%s1 + $0x148] sm:$0xff]
    %v92 = vld [vmem:[%s1 + $0x150] sm:$0xff]
    %v93 = vld [vmem:[%s1 + $0x158] sm:$0xff]
    %v94 = vld [vmem:[%s1 + $0x160] sm:$0xff]
    %v95 = vld [vmem:[%s1 + $0x168] sm:$0xff]
    %v96 = vld [vmem:[%s1 + $0x170] sm:$0xff]
    %v97 = vld [vmem:[%s1 + $0x178] sm:$0xff]
    %v98 = vld [vmem:[%s1 + $0x180] sm:$0xff]
    %v99 = vld [vmem:[%s1 + $0x188] sm:$0xff]
    %v100 = vld [vmem:[%s1 + $0x190] sm:$0xff]
    %v101 = vld [vmem:[%s1 + $0x198] sm:$0xff]
    %v102 = vld [vmem:[%s1 + $0x1a0] sm:$0xff]
    %v103 = vld [vmem:[%s1 + $0x1a8] sm:$0xff]
    %v104 = vld [vmem:[%s1 + $0x1b0] sm:$0xff]
    %v105 = vld [vmem:[%s1 + $0x1b8] sm:$0xff]
    %v106 = vld [vmem:[%s1 + $0x1c0] sm:$0xff]
    %v107 = vld [vmem:[%s1 + $0x1c8] sm:$0xff]
    %v108 = vld [vmem:[%s1 + $0x1d0] sm:$0xff]
    %v109 = vld [vmem:[%s1 + $0x1d8] sm:$0xff]
    %v110 = vld [vmem:[%s1 + $0x1e0] sm:$0xff]
    %v111 = vld [vmem:[%s1 + $0x1e8] sm:$0xff]
    %v112 = vld [vmem:[%s1 + $0x1f0] sm:$0xff]
    %v113 = vld [vmem:[%s1 + $0x1f8] sm:$0xff]
    %v114 = vld [vmem:[%s1 + $0x200] sm:$0xff]
    %v115 = vld [vmem:[%s1 + $0x208] sm:$0xff]
    %v116 = vld [vmem:[%s1 + $0x210] sm:$0xff]
    %v117 = vld [vmem:[%s1 + $0x218] sm:$0xff]
    %v118 = vld [vmem:[%s1 + $0x220] sm:$0xff]
    %v119 = vld [vmem:[%s1 + $0x228] sm:$0xff]
    %v120 = vld [vmem:[%s1 + $0x230] sm:$0xff]
    %v121 = vld [vmem:[%s1 + $0x238] sm:$0xff]
    %v122 = vld [vmem:[%s1 + $0x240] sm:$0xff]
    %v123 = vld [vmem:[%s1 + $0x248] sm:$0xff]
    %v124 = vld [vmem:[%s1 + $0x250] sm:$0xff]
    %v125 = vld [vmem:[%s1 + $0x258] sm:$0xff]
    %v126 = vld [vmem:[%s1 + $0x260] sm:$0xff]
    %v127 = vld [vmem:[%s1 + $0x268] sm:$0xff]
    %v128 = vld [vmem:[%s1 + $0x270] sm:$0xff]
    %v129 = vld [vmem:[%s1 + $0x278] sm:$0xff]
    %v130 = vld [vmem:[%s1 + $0x280] sm:$0xff]
    %v131 = vld [vmem:[%s1 + $0x288] sm:$0xff]
    %v132 = vld [vmem:[%s1 + $0x290] sm:$0xff]
    %v133 = vld [vmem:[%s1 + $0x298] sm:$0xff]
    %v134 = vld [vmem:[%s1 + $0x2a0] sm:$0xff]
    %v135 = vld [vmem:[%s1 + $0x2a8] sm:$0xff]
    %v136 = vld [vmem:[%s1 + $0x2b0] sm:$0xff]
    %v137 = vld [vmem:[%s1 + $0x2b8] sm:$0xff]
    %v138 = vld [vmem:[%s1 + $0x2c0] sm:$0xff]
    %v139 = vld [vmem:[%s1 + $0x2c8] sm:$0xff]
    %v140 = vld [vmem:[%s1 + $0x2d0] sm:$0xff]
    %v141 = vld [vmem:[%s1 + $0x2d8] sm:$0xff]
    %v142 = vld [vmem:[%s1 + $0x2e0] sm:$0xff]
    %v143 = vld [vmem:[%s1 + $0x2e8] sm:$0xff]
    %v144 = vld [vmem:[%s1 + $0x2f0] sm:$0xff]
    %v145 = vld [vmem:[%s1 + $0x2f8] sm:$0xff]
    %v146 = vld [vmem:[%s1 + $0x300] sm:$0xff]
    %v147 = vld [vmem:[%s1 + $0x308] sm:$0xff]
    %v148 = vld [vmem:[%s1 + $0x310] sm:$0xff]
    %v149 = vld [vmem:[%s1 + $0x318] sm:$0xff]
    %v150 = vld [vmem:[%s1 + $0x320] sm:$0xff]
    %v151 = vld [vmem:[%s1 + $0x328] sm:$0xff]
    %v152 = vld [vmem:[%s1 + $0x330] sm:$0xff]
    %v153 = vld [vmem:[%s1 + $0x338] sm:$0xff]
    %v154 = vld [vmem:[%s1 + $0x340] sm:$0xff]
    %v155 = vld [vmem:[%s1 + $0x348] sm:$0xff]
    %v156 = vld [vmem:[%s1 + $0x350] sm:$0xff]
    %v157 = vld [vmem:[%s1 + $0x358] sm:$0xff]
    %v158 = vld [vmem:[%s1 + $0x360] sm:$0xff]
    %v159 = vld [vmem:[%s1 + $0x368] sm:$0xff]
    %v160 = vld [vmem:[%s1 + $0x370] sm:$0xff]
    %v161 = vld [vmem:[%s1 + $0x378] sm:$0xff]
    %v162 = vld [vmem:[%s1 + $0x380] sm:$0xff]
    %v163 = vld [vmem:[%s1 + $0x388] sm:$0xff]
    %v164 = vld [vmem:[%s1 + $0x390] sm:$0xff]
    %v165 = vld [vmem:[%s1 + $0x398] sm:$0xff]
    %v166 = vld [vmem:[%s1 + $0x3a0] sm:$0x33]
    %v167 = vld [vmem:[%s2] sm:$0x3]
    %v169 = vlaneseq
    %v170 = vshrl.u32 %v169, 7
    %v171 = vsub.s32 0, %v170
    %v172 = vrot.slane %v167, %v171
    %v173 = vlaneseq
    %v174 = vshrl.u32 %v173, 7
    %v175 = vsub.s32 1, %v174
    %v176 = vrot.slane %v167, %v175
    %v183 = vunpack.c.l.b16 %v46
    %v184 = vunpack.c.h.b16 %v46
    %v185 = vunpack.c.l.b16 %v47
    %v186 = vunpack.c.h.b16 %v47
    %v187 = vunpack.c.l.b16 %v48
    %v188 = vunpack.c.h.b16 %v48
    %v189 = vunpack.c.l.b16 %v49
    %v190 = vunpack.c.h.b16 %v49
    %v191 = vpack.c.b16 %v183, %v183
    %v192 = vpack.c.b16 %v184, %v184
    %v193 = vpack.c.b16 %v185, %v185
    %v194 = vpack.c.b16 %v186, %v186
    %v195 = vpack.c.b16 %v187, %v187
    %v196 = vpack.c.b16 %v188, %v188
    %v197 = vpack.c.b16 %v189, %v189
    %v198 = vpack.c.b16 %v190, %v190
    %v323 = vunpack.c.l.b16 %v50
    %v324 = vunpack.c.h.b16 %v50
    %v325 = vunpack.c.l.b16 %v51
    %v326 = vunpack.c.h.b16 %v51
    %v327 = vunpack.c.l.b16 %v52
    %v328 = vunpack.c.h.b16 %v52
    %v329 = vunpack.c.l.b16 %v53
    %v330 = vunpack.c.h.b16 %v53
    %v331 = vunpack.c.l.b16 %v54
    %v332 = vunpack.c.h.b16 %v54
    %v333 = vunpack.c.l.b16 %v55
    %v334 = vunpack.c.h.b16 %v55
    %v335 = vunpack.c.l.b16 %v56
    %v336 = vunpack.c.h.b16 %v56
    %v337 = vunpack.c.l.b16 %v57
    %v338 = vunpack.c.h.b16 %v57
    %v339 = vunpack.c.l.b16 %v58
    %v340 = vunpack.c.h.b16 %v58
    %v341 = vunpack.c.l.b16 %v59
    %v342 = vunpack.c.h.b16 %v59
    %v343 = vunpack.c.l.b16 %v60
    %v344 = vunpack.c.h.b16 %v60
    %v345 = vunpack.c.l.b16 %v61
    %v346 = vunpack.c.h.b16 %v61
    %v347 = vunpack.c.l.b16 %v62
    %v348 = vunpack.c.h.b16 %v62
    %v349 = vunpack.c.l.b16 %v63
    %v350 = vunpack.c.h.b16 %v63
    %v351 = vunpack.c.l.b16 %v64
    %v352 = vunpack.c.h.b16 %v64
    %v353 = vunpack.c.l.b16 %v65
    %v354 = vunpack.c.h.b16 %v65
    %v355 = vunpack.c.l.b16 %v66
    %v356 = vunpack.c.h.b16 %v66
    %v357 = vunpack.c.l.b16 %v67
    %v358 = vunpack.c.h.b16 %v67
    %v359 = vunpack.c.l.b16 %v68
    %v360 = vunpack.c.h.b16 %v68
    %v361 = vunpack.c.l.b16 %v69
    %v362 = vunpack.c.h.b16 %v69
    %v363 = vunpack.c.l.b16 %v70
    %v364 = vunpack.c.h.b16 %v70
    %v365 = vunpack.c.l.b16 %v71
    %v366 = vunpack.c.h.b16 %v71
    %v367 = vunpack.c.l.b16 %v72
    %v368 = vunpack.c.h.b16 %v72
    %v369 = vunpack.c.l.b16 %v73
    %v370 = vunpack.c.h.b16 %v73
    %v371 = vunpack.c.l.b16 %v74
    %v372 = vunpack.c.h.b16 %v74
    %v373 = vunpack.c.l.b16 %v75
    %v374 = vunpack.c.h.b16 %v75
    %v375 = vunpack.c.l.b16 %v76
    %v376 = vunpack.c.h.b16 %v76
    %v377 = vunpack.c.l.b16 %v77
    %v378 = vunpack.c.h.b16 %v77
    %v379 = vunpack.c.l.b16 %v78
    %v380 = vunpack.c.h.b16 %v78
    %v381 = vunpack.c.l.b16 %v79
    %v382 = vunpack.c.h.b16 %v79
    %v383 = vunpack.c.l.b16 %v80
    %v384 = vunpack.c.h.b16 %v80
    %v385 = vunpack.c.l.b16 %v81
    %v386 = vunpack.c.h.b16 %v81
    %v387 = vunpack.c.l.b16 %v82
    %v388 = vunpack.c.h.b16 %v82
    %v389 = vunpack.c.l.b16 %v83
    %v390 = vunpack.c.h.b16 %v83
    %v391 = vunpack.c.l.b16 %v84
    %v392 = vunpack.c.h.b16 %v84
    %v393 = vunpack.c.l.b16 %v85
    %v394 = vunpack.c.h.b16 %v85
    %v395 = vunpack.c.l.b16 %v86
    %v396 = vunpack.c.h.b16 %v86
    %v397 = vunpack.c.l.b16 %v87
    %v398 = vunpack.c.h.b16 %v87
    %v399 = vunpack.c.l.b16 %v88
    %v400 = vunpack.c.h.b16 %v88
    %v401 = vunpack.c.l.b16 %v89
    %v402 = vunpack.c.h.b16 %v89
    %v403 = vunpack.c.l.b16 %v90
    %v404 = vunpack.c.h.b16 %v90
    %v405 = vunpack.c.l.b16 %v91
    %v406 = vunpack.c.h.b16 %v91
    %v407 = vunpack.c.l.b16 %v92
    %v408 = vunpack.c.h.b16 %v92
    %v409 = vunpack.c.l.b16 %v93
    %v410 = vunpack.c.h.b16 %v93
    %v411 = vunpack.c.l.b16 %v94
    %v412 = vunpack.c.h.b16 %v94
    %v413 = vunpack.c.l.b16 %v95
    %v414 = vunpack.c.h.b16 %v95
    %v415 = vunpack.c.l.b16 %v96
    %v416 = vunpack.c.h.b16 %v96
    %v417 = vunpack.c.l.b16 %v97
    %v418 = vunpack.c.h.b16 %v97
    %v419 = vunpack.c.l.b16 %v98
    %v420 = vunpack.c.h.b16 %v98
    %v421 = vunpack.c.l.b16 %v99
    %v422 = vunpack.c.h.b16 %v99
    %v423 = vunpack.c.l.b16 %v100
    %v424 = vunpack.c.h.b16 %v100
    %v425 = vunpack.c.l.b16 %v101
    %v426 = vunpack.c.h.b16 %v101
    %v427 = vunpack.c.l.b16 %v102
    %v428 = vunpack.c.h.b16 %v102
    %v429 = vunpack.c.l.b16 %v103
    %v430 = vunpack.c.h.b16 %v103
    %v431 = vunpack.c.l.b16 %v104
    %v432 = vunpack.c.h.b16 %v104
    %v433 = vunpack.c.l.b16 %v105
    %v434 = vunpack.c.h.b16 %v105
    %v435 = vunpack.c.l.b16 %v106
    %v436 = vunpack.c.h.b16 %v106
    %v437 = vunpack.c.l.b16 %v107
    %v438 = vunpack.c.h.b16 %v107
    %v439 = vunpack.c.l.b16 %v108
    %v440 = vunpack.c.h.b16 %v108
    %v441 = vunpack.c.l.b16 %v109
    %v442 = vunpack.c.h.b16 %v109
    %v443 = vunpack.c.l.b16 %v110
    %v444 = vunpack.c.h.b16 %v110
    %v445 = vunpack.c.l.b16 %v111
    %v446 = vunpack.c.h.b16 %v111
    %v447 = vunpack.c.l.b16 %v112
    %v448 = vunpack.c.h.b16 %v112
    %v449 = vunpack.c.l.b16 %v113
    %v450 = vunpack.c.h.b16 %v113
    %v451 = vunpack.c.l.b16 %v114
    %v452 = vunpack.c.h.b16 %v114
    %v453 = vunpack.c.l.b16 %v115
    %v454 = vunpack.c.h.b16 %v115
    %v455 = vunpack.c.l.b16 %v116
    %v456 = vunpack.c.h.b16 %v116
    %v457 = vunpack.c.l.b16 %v117
    %v458 = vunpack.c.h.b16 %v117
    %v459 = vunpack.c.l.b16 %v118
    %v460 = vunpack.c.h.b16 %v118
    %v461 = vunpack.c.l.b16 %v119
    %v462 = vunpack.c.h.b16 %v119
    %v463 = vunpack.c.l.b16 %v120
    %v464 = vunpack.c.h.b16 %v120
    %v465 = vunpack.c.l.b16 %v121
    %v466 = vunpack.c.h.b16 %v121
    %v467 = vunpack.c.l.b16 %v122
    %v468 = vunpack.c.h.b16 %v122
    %v469 = vunpack.c.l.b16 %v123
    %v470 = vunpack.c.h.b16 %v123
    %v471 = vunpack.c.l.b16 %v124
    %v472 = vunpack.c.h.b16 %v124
    %v473 = vunpack.c.l.b16 %v125
    %v474 = vunpack.c.h.b16 %v125
    %v475 = vunpack.c.l.b16 %v126
    %v476 = vunpack.c.h.b16 %v126
    %v477 = vunpack.c.l.b16 %v127
    %v478 = vunpack.c.h.b16 %v127
    %v479 = vunpack.c.l.b16 %v128
    %v480 = vunpack.c.h.b16 %v128
    %v481 = vunpack.c.l.b16 %v129
    %v482 = vunpack.c.h.b16 %v129
    %v483 = vunpack.c.l.b16 %v130
    %v484 = vunpack.c.h.b16 %v130
    %v485 = vunpack.c.l.b16 %v131
    %v486 = vunpack.c.h.b16 %v131
    %v487 = vunpack.c.l.b16 %v132
    %v488 = vunpack.c.h.b16 %v132
    %v489 = vunpack.c.l.b16 %v133
    %v490 = vunpack.c.h.b16 %v133
    %v491 = vunpack.c.l.b16 %v134
    %v492 = vunpack.c.h.b16 %v134
    %v493 = vunpack.c.l.b16 %v135
    %v494 = vunpack.c.h.b16 %v135
    %v495 = vunpack.c.l.b16 %v136
    %v496 = vunpack.c.h.b16 %v136
    %v497 = vunpack.c.l.b16 %v137
    %v498 = vunpack.c.h.b16 %v137
    %v499 = vunpack.c.l.b16 %v138
    %v500 = vunpack.c.h.b16 %v138
    %v501 = vunpack.c.l.b16 %v139
    %v502 = vunpack.c.h.b16 %v139
    %v503 = vunpack.c.l.b16 %v140
    %v504 = vunpack.c.h.b16 %v140
    %v505 = vunpack.c.l.b16 %v141
    %v506 = vunpack.c.h.b16 %v141
    %v507 = vunpack.c.l.b16 %v142
    %v508 = vunpack.c.h.b16 %v142
    %v509 = vunpack.c.l.b16 %v143
    %v510 = vunpack.c.h.b16 %v143
    %v511 = vunpack.c.l.b16 %v144
    %v512 = vunpack.c.h.b16 %v144
    %v513 = vunpack.c.l.b16 %v145
    %v514 = vunpack.c.h.b16 %v145
    %v515 = vunpack.c.l.b16 %v146
    %v516 = vunpack.c.h.b16 %v146
    %v517 = vunpack.c.l.b16 %v147
    %v518 = vunpack.c.h.b16 %v147
    %v519 = vunpack.c.l.b16 %v148
    %v520 = vunpack.c.h.b16 %v148
    %v521 = vunpack.c.l.b16 %v149
    %v522 = vunpack.c.h.b16 %v149
    %v523 = vunpack.c.l.b16 %v150
    %v524 = vunpack.c.h.b16 %v150
    %v525 = vunpack.c.l.b16 %v151
    %v526 = vunpack.c.h.b16 %v151
    %v527 = vunpack.c.l.b16 %v152
    %v528 = vunpack.c.h.b16 %v152
    %v529 = vunpack.c.l.b16 %v153
    %v530 = vunpack.c.h.b16 %v153
    %v531 = vunpack.c.l.b16 %v154
    %v532 = vunpack.c.h.b16 %v154
    %v533 = vunpack.c.l.b16 %v155
    %v534 = vunpack.c.h.b16 %v155
    %v535 = vunpack.c.l.b16 %v156
    %v536 = vunpack.c.h.b16 %v156
    %v537 = vunpack.c.l.b16 %v157
    %v538 = vunpack.c.h.b16 %v157
    %v539 = vunpack.c.l.b16 %v158
    %v540 = vunpack.c.h.b16 %v158
    %v541 = vunpack.c.l.b16 %v159
    %v542 = vunpack.c.h.b16 %v159
    %v543 = vunpack.c.l.b16 %v160
    %v544 = vunpack.c.h.b16 %v160
    %v545 = vunpack.c.l.b16 %v161
    %v546 = vunpack.c.h.b16 %v161
    %v547 = vunpack.c.l.b16 %v162
    %v548 = vunpack.c.h.b16 %v162
    %v549 = vunpack.c.l.b16 %v163
    %v550 = vunpack.c.h.b16 %v163
    %v551 = vunpack.c.l.b16 %v164
    %v552 = vunpack.c.h.b16 %v164
    %v553 = vunpack.c.l.b16 %v165
    %v554 = vunpack.c.h.b16 %v165
    %v555 = vunpack.c.l.b16 %v166
    %v556 = vunpack.c.h.b16 %v166
    %v557 = vpack.c.b16 %v325, %v323
    %v558 = vpack.c.b16 %v326, %v324
    %v559 = vpack.c.b16 %v329, %v327
    %v560 = vpack.c.b16 %v330, %v328
    %v561 = vpack.c.b16 %v333, %v331
    %v562 = vpack.c.b16 %v334, %v332
    %v563 = vpack.c.b16 %v337, %v335
    %v564 = vpack.c.b16 %v338, %v336
    %v565 = vpack.c.b16 %v341, %v339
    %v566 = vpack.c.b16 %v342, %v340
    %v567 = vpack.c.b16 %v345, %v343
    %v568 = vpack.c.b16 %v346, %v344
    %v569 = vpack.c.b16 %v349, %v347
    %v570 = vpack.c.b16 %v350, %v348
    %v571 = vpack.c.b16 %v353, %v351
    %v572 = vpack.c.b16 %v354, %v352
    %v573 = vpack.c.b16 %v357, %v355
    %v574 = vpack.c.b16 %v358, %v356
    %v575 = vpack.c.b16 %v361, %v359
    %v576 = vpack.c.b16 %v362, %v360
    %v577 = vpack.c.b16 %v365, %v363
    %v578 = vpack.c.b16 %v366, %v364
    %v579 = vpack.c.b16 %v369, %v367
    %v580 = vpack.c.b16 %v370, %v368
    %v581 = vpack.c.b16 %v373, %v371
    %v582 = vpack.c.b16 %v374, %v372
    %v583 = vpack.c.b16 %v377, %v375
    %v584 = vpack.c.b16 %v378, %v376
    %v585 = vpack.c.b16 %v381, %v379
    %v586 = vpack.c.b16 %v382, %v380
    %v587 = vpack.c.b16 %v385, %v383
    %v588 = vpack.c.b16 %v386, %v384
    %v589 = vpack.c.b16 %v389, %v387
    %v590 = vpack.c.b16 %v390, %v388
    %v591 = vpack.c.b16 %v393, %v391
    %v592 = vpack.c.b16 %v394, %v392
    %v593 = vpack.c.b16 %v397, %v395
    %v594 = vpack.c.b16 %v398, %v396
    %v595 = vpack.c.b16 %v401, %v399
    %v596 = vpack.c.b16 %v402, %v400
    %v597 = vpack.c.b16 %v405, %v403
    %v598 = vpack.c.b16 %v406, %v404
    %v599 = vpack.c.b16 %v409, %v407
    %v600 = vpack.c.b16 %v410, %v408
    %v601 = vpack.c.b16 %v413, %v411
    %v602 = vpack.c.b16 %v414, %v412
    %v603 = vpack.c.b16 %v417, %v415
    %v604 = vpack.c.b16 %v418, %v416
    %v605 = vpack.c.b16 %v421, %v419
    %v606 = vpack.c.b16 %v422, %v420
    %v607 = vpack.c.b16 %v425, %v423
    %v608 = vpack.c.b16 %v426, %v424
    %v609 = vpack.c.b16 %v429, %v427
    %v610 = vpack.c.b16 %v430, %v428
    %v611 = vpack.c.b16 %v433, %v431
    %v612 = vpack.c.b16 %v434, %v432
    %v613 = vpack.c.b16 %v437, %v435
    %v614 = vpack.c.b16 %v438, %v436
    %v615 = vpack.c.b16 %v441, %v439
    %v616 = vpack.c.b16 %v442, %v440
    %v617 = vpack.c.b16 %v445, %v443
    %v618 = vpack.c.b16 %v446, %v444
    %v619 = vpack.c.b16 %v449, %v447
    %v620 = vpack.c.b16 %v450, %v448
    %v621 = vpack.c.b16 %v453, %v451
    %v622 = vpack.c.b16 %v454, %v452
    %v623 = vpack.c.b16 %v457, %v455
    %v624 = vpack.c.b16 %v458, %v456
    %v625 = vpack.c.b16 %v461, %v459
    %v626 = vpack.c.b16 %v462, %v460
    %v627 = vpack.c.b16 %v465, %v463
    %v628 = vpack.c.b16 %v466, %v464
    %v629 = vpack.c.b16 %v469, %v467
    %v630 = vpack.c.b16 %v470, %v468
    %v631 = vpack.c.b16 %v473, %v471
    %v632 = vpack.c.b16 %v474, %v472
    %v633 = vpack.c.b16 %v477, %v475
    %v634 = vpack.c.b16 %v478, %v476
    %v635 = vpack.c.b16 %v481, %v479
    %v636 = vpack.c.b16 %v482, %v480
    %v637 = vpack.c.b16 %v485, %v483
    %v638 = vpack.c.b16 %v486, %v484
    %v639 = vpack.c.b16 %v489, %v487
    %v640 = vpack.c.b16 %v490, %v488
    %v641 = vpack.c.b16 %v493, %v491
    %v642 = vpack.c.b16 %v494, %v492
    %v643 = vpack.c.b16 %v497, %v495
    %v644 = vpack.c.b16 %v498, %v496
    %v645 = vpack.c.b16 %v501, %v499
    %v646 = vpack.c.b16 %v502, %v500
    %v647 = vpack.c.b16 %v505, %v503
    %v648 = vpack.c.b16 %v506, %v504
    %v649 = vpack.c.b16 %v509, %v507
    %v650 = vpack.c.b16 %v510, %v508
    %v651 = vpack.c.b16 %v513, %v511
    %v652 = vpack.c.b16 %v514, %v512
    %v653 = vpack.c.b16 %v517, %v515
    %v654 = vpack.c.b16 %v518, %v516
    %v655 = vpack.c.b16 %v521, %v519
    %v656 = vpack.c.b16 %v522, %v520
    %v657 = vpack.c.b16 %v525, %v523
    %v658 = vpack.c.b16 %v526, %v524
    %v659 = vpack.c.b16 %v529, %v527
    %v660 = vpack.c.b16 %v530, %v528
    %v661 = vpack.c.b16 %v533, %v531
    %v662 = vpack.c.b16 %v534, %v532
    %v663 = vpack.c.b16 %v537, %v535
    %v664 = vpack.c.b16 %v538, %v536
    %v665 = vpack.c.b16 %v541, %v539
    %v666 = vpack.c.b16 %v542, %v540
    %v667 = vpack.c.b16 %v545, %v543
    %v668 = vpack.c.b16 %v546, %v544
    %v669 = vpack.c.b16 %v549, %v547
    %v670 = vpack.c.b16 %v550, %v548
    %v671 = vpack.c.b16 %v553, %v551
    %v672 = vpack.c.b16 %v554, %v552
    %v673 = vpack.c.b16 %v555, %v555
    %v674 = vpack.c.b16 %v556, %v556
    %vm791 = vcmask 293888
    %v793 = vsel %vm791, %v198, 0
    %vm795 = vcmask 1041408
    %v797 = vsel %vm795, %v673, 0
    %v800 = vsel %vm795, %v674, 0
    %802 = vmatprep.subr.bf16.mxu0 %v558
    %803 = vmatpush1.bf16.msra.mxu0 %v557
    %804 = vmatprep.subr.bf16.mxu0 %v560
    %805 = vmatpush1.bf16.msra.mxu0 %v559
    %806 = vmatprep.subr.bf16.mxu0 %v562
    %807 = vmatpush1.bf16.msra.mxu0 %v561
    %808 = vmatprep.subr.bf16.mxu0 %v564
    %809 = vmatpush1.bf16.msra.mxu0 %v563
    %810 = vmatprep.subr.bf16.mxu0 %v566
    %811 = vmatpush1.bf16.msra.mxu0 %v565
    %812 = vmatprep.subr.bf16.mxu0 %v568
    %813 = vmatpush1.bf16.msra.mxu0 %v567
    %814 = vmatprep.subr.bf16.mxu0 %v570
    %815 = vmatpush1.bf16.msra.mxu0 %v569
    %816 = vmatprep.subr.bf16.mxu0 %v572
    %817 = vmatpush1.bf16.msra.mxu0 %v571
    %818 = vmatprep.subr.bf16.mxu0 %v574
    %819 = vmatpush1.bf16.msra.mxu0 %v573
    %820 = vmatprep.subr.bf16.mxu0 %v576
    %821 = vmatpush1.bf16.msra.mxu0 %v575
    %822 = vmatprep.subr.bf16.mxu0 %v578
    %823 = vmatpush1.bf16.msra.mxu0 %v577
    %824 = vmatprep.subr.bf16.mxu0 %v580
    %825 = vmatpush1.bf16.msra.mxu0 %v579
    %826 = vmatprep.subr.bf16.mxu0 %v582
    %827 = vmatpush1.bf16.msra.mxu0 %v581
    %828 = vmatprep.subr.bf16.mxu0 %v584
    %829 = vmatpush1.bf16.msra.mxu0 %v583
    %830 = vmatprep.subr.bf16.mxu0 %v586
    %831 = vmatpush1.bf16.msra.mxu0 %v585
    %832 = vmatprep.subr.bf16.mxu0 %v588
    %833 = vmatpush1.bf16.msra.mxu0 %v587
    %834 = vmatprep.mubr.bf16.mxu0 %v192
    %835 = vmatmul.mubr.bf16.gmra.mrb[0].mxu0 %v191
    %v836 = vpop.f32.mrb[0].mxu0
    %v837 = vadd.f32 %v172, %v836
    %v838 = vpop.f32.mrb[0].mxu0
    %v839 = vadd.f32 %v176, %v838
    %v840 = vpop.f32.mrb[0].mxu0
    %v841 = vpop.f32.mrb[0].mxu0
    %842 = vdwg.mxu0
    %843 = vmatprep.subr.bf16.mxu0 %v590
    %844 = vmatpush1.bf16.msra.mxu0 %v589
    %845 = vmatprep.subr.bf16.mxu0 %v592
    %846 = vmatpush1.bf16.msra.mxu0 %v591
    %847 = vmatprep.subr.bf16.mxu0 %v594
    %848 = vmatpush1.bf16.msra.mxu0 %v593
    %849 = vmatprep.subr.bf16.mxu0 %v596
    %850 = vmatpush1.bf16.msra.mxu0 %v595
    %851 = vmatprep.subr.bf16.mxu0 %v598
    %852 = vmatpush1.bf16.msra.mxu0 %v597
    %853 = vmatprep.subr.bf16.mxu0 %v600
    %854 = vmatpush1.bf16.msra.mxu0 %v599
    %855 = vmatprep.subr.bf16.mxu0 %v602
    %856 = vmatpush1.bf16.msra.mxu0 %v601
    %857 = vmatprep.subr.bf16.mxu0 %v604
    %858 = vmatpush1.bf16.msra.mxu0 %v603
    %859 = vmatprep.subr.bf16.mxu0 %v606
    %860 = vmatpush1.bf16.msra.mxu0 %v605
    %861 = vmatprep.subr.bf16.mxu0 %v608
    %862 = vmatpush1.bf16.msra.mxu0 %v607
    %863 = vmatprep.subr.bf16.mxu0 %v610
    %864 = vmatpush1.bf16.msra.mxu0 %v609
    %865 = vmatprep.subr.bf16.mxu0 %v612
    %866 = vmatpush1.bf16.msra.mxu0 %v611
    %867 = vmatprep.subr.bf16.mxu0 %v614
    %868 = vmatpush1.bf16.msra.mxu0 %v613
    %869 = vmatprep.subr.bf16.mxu0 %v616
    %870 = vmatpush1.bf16.msra.mxu0 %v615
    %871 = vmatprep.subr.bf16.mxu0 %v618
    %872 = vmatpush1.bf16.msra.mxu0 %v617
    %873 = vmatprep.subr.bf16.mxu0 %v620
    %874 = vmatpush1.bf16.msra.mxu0 %v619
    %875 = vmatprep.mubr.bf16.mxu0 %v194
    %876 = vmatmul.mubr.bf16.gmra.mrb[0].mxu0 %v193
    %v877 = vpop.f32.mrb[0].mxu0
    %v878 = vadd.f32 %v837, %v877
    %v879 = vpop.f32.mrb[0].mxu0
    %v880 = vadd.f32 %v839, %v879
    %v881 = vpop.f32.mrb[0].mxu0
    %v882 = vpop.f32.mrb[0].mxu0
    %883 = vdwg.mxu0
    %884 = vmatprep.subr.bf16.mxu0 %v622
    %885 = vmatpush1.bf16.msra.mxu0 %v621
    %886 = vmatprep.subr.bf16.mxu0 %v624
    %887 = vmatpush1.bf16.msra.mxu0 %v623
    %888 = vmatprep.subr.bf16.mxu0 %v626
    %889 = vmatpush1.bf16.msra.mxu0 %v625
    %890 = vmatprep.subr.bf16.mxu0 %v628
    %891 = vmatpush1.bf16.msra.mxu0 %v627
    %892 = vmatprep.subr.bf16.mxu0 %v630
    %893 = vmatpush1.bf16.msra.mxu0 %v629
    %894 = vmatprep.subr.bf16.mxu0 %v632
    %895 = vmatpush1.bf16.msra.mxu0 %v631
    %896 = vmatprep.subr.bf16.mxu0 %v634
    %897 = vmatpush1.bf16.msra.mxu0 %v633
    %898 = vmatprep.subr.bf16.mxu0 %v636
    %899 = vmatpush1.bf16.msra.mxu0 %v635
    %900 = vmatprep.subr.bf16.mxu0 %v638
    %901 = vmatpush1.bf16.msra.mxu0 %v637
    %902 = vmatprep.subr.bf16.mxu0 %v640
    %903 = vmatpush1.bf16.msra.mxu0 %v639
    %904 = vmatprep.subr.bf16.mxu0 %v642
    %905 = vmatpush1.bf16.msra.mxu0 %v641
    %906 = vmatprep.subr.bf16.mxu0 %v644
    %907 = vmatpush1.bf16.msra.mxu0 %v643
    %908 = vmatprep.subr.bf16.mxu0 %v646
    %909 = vmatpush1.bf16.msra.mxu0 %v645
    %910 = vmatprep.subr.bf16.mxu0 %v648
    %911 = vmatpush1.bf16.msra.mxu0 %v647
    %912 = vmatprep.subr.bf16.mxu0 %v650
    %913 = vmatpush1.bf16.msra.mxu0 %v649
    %914 = vmatprep.subr.bf16.mxu0 %v652
    %915 = vmatpush1.bf16.msra.mxu0 %v651
    %916 = vmatprep.mubr.bf16.mxu0 %v196
    %917 = vmatmul.mubr.bf16.gmra.mrb[0].mxu0 %v195
    %v918 = vpop.f32.mrb[0].mxu0
    %v919 = vadd.f32 %v878, %v918
    %v920 = vpop.f32.mrb[0].mxu0
    %v921 = vadd.f32 %v880, %v920
    %v922 = vpop.f32.mrb[0].mxu0
    %v923 = vpop.f32.mrb[0].mxu0
    %924 = vdwg.mxu0
    %925 = vmatprep.subr.bf16.mxu0 %v654
    %926 = vmatpush1.bf16.msra.mxu0 %v653
    %927 = vmatprep.subr.bf16.mxu0 %v656
    %928 = vmatpush1.bf16.msra.mxu0 %v655
    %929 = vmatprep.subr.bf16.mxu0 %v658
    %930 = vmatpush1.bf16.msra.mxu0 %v657
    %931 = vmatprep.subr.bf16.mxu0 %v660
    %932 = vmatpush1.bf16.msra.mxu0 %v659
    %933 = vmatprep.subr.bf16.mxu0 %v662
    %934 = vmatpush1.bf16.msra.mxu0 %v661
    %935 = vmatprep.subr.bf16.mxu0 %v664
    %936 = vmatpush1.bf16.msra.mxu0 %v663
    %937 = vmatprep.subr.bf16.mxu0 %v666
    %938 = vmatpush1.bf16.msra.mxu0 %v665
    %939 = vmatprep.subr.bf16.mxu0 %v668
    %940 = vmatpush1.bf16.msra.mxu0 %v667
    %941 = vmatprep.subr.bf16.mxu0 %v670
    %942 = vmatpush1.bf16.msra.mxu0 %v669
    %943 = vmatprep.subr.bf16.mxu0 %v672
    %944 = vmatpush1.bf16.msra.mxu0 %v671
    %945 = vmatprep.subr.bf16.mxu0 %v800
    %946 = vmatpush1.bf16.msra.mxu0 %v797
    %947 = vmatprep.subr.bf16.mxu0 0
    %948 = vmatpush1.bf16.msra.mxu0 0
    %949 = vmatprep.subr.bf16.mxu0 0
    %950 = vmatpush1.bf16.msra.mxu0 0
    %951 = vmatprep.subr.bf16.mxu0 0
    %952 = vmatpush1.bf16.msra.mxu0 0
    %953 = vmatprep.subr.bf16.mxu0 0
    %954 = vmatpush1.bf16.msra.mxu0 0
    %955 = vmatprep.subr.bf16.mxu0 0
    %956 = vmatpush1.bf16.msra.mxu0 0
    %957 = vmatprep.mubr.bf16.mxu0 %v793
    %958 = vmatmul.mubr.bf16.gmra.mrb[0].mxu0 %v197
    %v959 = vpop.f32.mrb[0].mxu0
    %v960 = vadd.f32 %v919, %v959
    %v961 = vpop.f32.mrb[0].mxu0
    %v962 = vadd.f32 %v921, %v961
    %v963 = vpop.f32.mrb[0].mxu0
    %v964 = vpop.f32.mrb[0].mxu0
    %965 = vdwg.mxu0
    %v966 = vmax.f32 %v960, 0.0
    %v967 = vmax.f32 %v962, 0.0
    %v968 = vpack.c.bf16 %v966, %v966
    %v969 = vpack.c.bf16 %v967, %v967
    %v970 = vld [vmem:[%s3] sm:$0xf]
    %v971 = vld [vmem:[%s3 + $0x4] sm:$0xf]
    %v972 = vld [vmem:[%s3 + $0x8] sm:$0xf]
    %v973 = vld [vmem:[%s3 + $0xc] sm:$0xf]
    %v974 = vld [vmem:[%s3 + $0x10] sm:$0xf]
    %v975 = vld [vmem:[%s3 + $0x14] sm:$0xf]
    %v976 = vld [vmem:[%s3 + $0x18] sm:$0xf]
    %v977 = vld [vmem:[%s3 + $0x1c] sm:$0xf]
    %v978 = vld [vmem:[%s3 + $0x20] sm:$0xf]
    %v979 = vld [vmem:[%s3 + $0x24] sm:$0xf]
    %v980 = vld [vmem:[%s3 + $0x28] sm:$0xf]
    %v981 = vld [vmem:[%s3 + $0x2c] sm:$0xf]
    %v982 = vld [vmem:[%s3 + $0x30] sm:$0xf]
    %v983 = vld [vmem:[%s3 + $0x34] sm:$0xf]
    %v984 = vld [vmem:[%s3 + $0x38] sm:$0xf]
    %v985 = vld [vmem:[%s3 + $0x3c] sm:$0xf]
    %v986 = vld [vmem:[%s3 + $0x40] sm:$0xf]
    %v987 = vld [vmem:[%s3 + $0x44] sm:$0xf]
    %v988 = vld [vmem:[%s3 + $0x48] sm:$0xf]
    %v989 = vld [vmem:[%s3 + $0x4c] sm:$0xf]
    %v990 = vld [vmem:[%s3 + $0x50] sm:$0xf]
    %v991 = vld [vmem:[%s3 + $0x54] sm:$0xf]
    %v992 = vld [vmem:[%s3 + $0x58] sm:$0xf]
    %v993 = vld [vmem:[%s3 + $0x5c] sm:$0xf]
    %v994 = vld [vmem:[%s3 + $0x60] sm:$0xf]
    %v995 = vld [vmem:[%s3 + $0x64] sm:$0xf]
    %v996 = vld [vmem:[%s3 + $0x68] sm:$0xf]
    %v997 = vld [vmem:[%s3 + $0x6c] sm:$0xf]
    %v998 = vld [vmem:[%s3 + $0x70] sm:$0xf]
    %v999 = vld [vmem:[%s3 + $0x74] sm:$0xf]
    %v1000 = vld [vmem:[%s3 + $0x78] sm:$0xf]
    %v1001 = vld [vmem:[%s3 + $0x7c] sm:$0xf]
    %v1002 = vld [vmem:[%s4] sm:$0x1]
    %v1004 = vlaneseq
    %v1005 = vshrl.u32 %v1004, 7
    %v1006 = vsub.s32 0, %v1005
    %v1007 = vrot.slane %v1002, %v1006
    %v1041 = vunpack.c.l.b16 %v970
    %v1042 = vunpack.c.l.b16 %v971
    %v1043 = vunpack.c.l.b16 %v972
    %v1044 = vunpack.c.l.b16 %v973
    %v1045 = vunpack.c.l.b16 %v974
    %v1046 = vunpack.c.l.b16 %v975
    %v1047 = vunpack.c.l.b16 %v976
    %v1048 = vunpack.c.l.b16 %v977
    %v1049 = vunpack.c.l.b16 %v978
    %v1050 = vunpack.c.l.b16 %v979
    %v1051 = vunpack.c.l.b16 %v980
    %v1052 = vunpack.c.l.b16 %v981
    %v1053 = vunpack.c.l.b16 %v982
    %v1054 = vunpack.c.l.b16 %v983
    %v1055 = vunpack.c.l.b16 %v984
    %v1056 = vunpack.c.l.b16 %v985
    %v1057 = vunpack.c.l.b16 %v986
    %v1058 = vunpack.c.l.b16 %v987
    %v1059 = vunpack.c.l.b16 %v988
    %v1060 = vunpack.c.l.b16 %v989
    %v1061 = vunpack.c.l.b16 %v990
    %v1062 = vunpack.c.l.b16 %v991
    %v1063 = vunpack.c.l.b16 %v992
    %v1064 = vunpack.c.l.b16 %v993
    %v1065 = vunpack.c.l.b16 %v994
    %v1066 = vunpack.c.l.b16 %v995
    %v1067 = vunpack.c.l.b16 %v996
    %v1068 = vunpack.c.l.b16 %v997
    %v1069 = vunpack.c.l.b16 %v998
    %v1070 = vunpack.c.l.b16 %v999
    %v1071 = vunpack.c.l.b16 %v1000
    %v1072 = vunpack.c.l.b16 %v1001
    %v1073 = vpack.c.b16 %v1042, %v1041
    %v1074 = vpack.c.b16 %v1044, %v1043
    %v1075 = vpack.c.b16 %v1046, %v1045
    %v1076 = vpack.c.b16 %v1048, %v1047
    %v1077 = vpack.c.b16 %v1050, %v1049
    %v1078 = vpack.c.b16 %v1052, %v1051
    %v1079 = vpack.c.b16 %v1054, %v1053
    %v1080 = vpack.c.b16 %v1056, %v1055
    %v1081 = vpack.c.b16 %v1058, %v1057
    %v1082 = vpack.c.b16 %v1060, %v1059
    %v1083 = vpack.c.b16 %v1062, %v1061
    %v1084 = vpack.c.b16 %v1064, %v1063
    %v1085 = vpack.c.b16 %v1066, %v1065
    %v1086 = vpack.c.b16 %v1068, %v1067
    %v1087 = vpack.c.b16 %v1070, %v1069
    %v1088 = vpack.c.b16 %v1072, %v1071
    %1105 = vmatprep.subr.bf16.mxu0 0
    %1106 = vmatpush1.bf16.msra.mxu0 %v1073
    %1107 = vmatprep.subr.bf16.mxu0 0
    %1108 = vmatpush1.bf16.msra.mxu0 %v1074
    %1109 = vmatprep.subr.bf16.mxu0 0
    %1110 = vmatpush1.bf16.msra.mxu0 %v1075
    %1111 = vmatprep.subr.bf16.mxu0 0
    %1112 = vmatpush1.bf16.msra.mxu0 %v1076
    %1113 = vmatprep.subr.bf16.mxu0 0
    %1114 = vmatpush1.bf16.msra.mxu0 %v1077
    %1115 = vmatprep.subr.bf16.mxu0 0
    %1116 = vmatpush1.bf16.msra.mxu0 %v1078
    %1117 = vmatprep.subr.bf16.mxu0 0
    %1118 = vmatpush1.bf16.msra.mxu0 %v1079
    %1119 = vmatprep.subr.bf16.mxu0 0
    %1120 = vmatpush1.bf16.msra.mxu0 %v1080
    %1121 = vmatprep.subr.bf16.mxu0 0
    %1122 = vmatpush1.bf16.msra.mxu0 %v1081
    %1123 = vmatprep.subr.bf16.mxu0 0
    %1124 = vmatpush1.bf16.msra.mxu0 %v1082
    %1125 = vmatprep.subr.bf16.mxu0 0
    %1126 = vmatpush1.bf16.msra.mxu0 %v1083
    %1127 = vmatprep.subr.bf16.mxu0 0
    %1128 = vmatpush1.bf16.msra.mxu0 %v1084
    %1129 = vmatprep.subr.bf16.mxu0 0
    %1130 = vmatpush1.bf16.msra.mxu0 %v1085
    %1131 = vmatprep.subr.bf16.mxu0 0
    %1132 = vmatpush1.bf16.msra.mxu0 %v1086
    %1133 = vmatprep.subr.bf16.mxu0 0
    %1134 = vmatpush1.bf16.msra.mxu0 %v1087
    %1135 = vmatprep.subr.bf16.mxu0 0
    %1136 = vmatpush1.bf16.msra.mxu0 %v1088
    %1137 = vmatprep.mubr.bf16.mxu0 %v969
    %1138 = vmatmul.mubr.bf16.gmra.mrb[0].mxu0 %v968
    %v1139 = vpop.f32.mrb[0].mxu0
    %v1140 = vadd.f32 %v1007, %v1139
    %v1141 = vpop.f32.mrb[0].mxu0
    %v1142 = vpop.f32.mrb[0].mxu0
    %v1143 = vpop.f32.mrb[0].mxu0
    %1144 = vdwg.mxu0
    %v1145 = vmax.f32 %v1140, 0.0
    %v1146 = vpack.c.bf16 %v1145, %v1145
    %v1147 = vld [vmem:[%s5] sm:$0xf]
    %v1148 = vld [vmem:[%s5 + $0x4] sm:$0xf]
    %v1149 = vld [vmem:[%s5 + $0x8] sm:$0xf]
    %v1150 = vld [vmem:[%s5 + $0xc] sm:$0xf]
    %v1151 = vld [vmem:[%s5 + $0x10] sm:$0xf]
    %v1152 = vld [vmem:[%s5 + $0x14] sm:$0xf]
    %v1153 = vld [vmem:[%s5 + $0x18] sm:$0xf]
    %v1154 = vld [vmem:[%s5 + $0x1c] sm:$0xf]
    %v1155 = vld [vmem:[%s5 + $0x20] sm:$0xf]
    %v1156 = vld [vmem:[%s5 + $0x24] sm:$0xf]
    %v1157 = vld [vmem:[%s5 + $0x28] sm:$0xf]
    %v1158 = vld [vmem:[%s5 + $0x2c] sm:$0xf]
    %v1159 = vld [vmem:[%s5 + $0x30] sm:$0xf]
    %v1160 = vld [vmem:[%s5 + $0x34] sm:$0xf]
    %v1161 = vld [vmem:[%s5 + $0x38] sm:$0xf]
    %v1162 = vld [vmem:[%s5 + $0x3c] sm:$0xf]
    %v1163 = vld [vmem:[%s6] sm:$0x1]
    %v1165 = vlaneseq
    %v1166 = vshrl.u32 %v1165, 7
    %v1167 = vsub.s32 0, %v1166
    %v1168 = vrot.slane %v1163, %v1167
    %v1186 = vunpack.c.l.b16 %v1147
    %v1187 = vunpack.c.l.b16 %v1148
    %v1188 = vunpack.c.l.b16 %v1149
    %v1189 = vunpack.c.l.b16 %v1150
    %v1190 = vunpack.c.l.b16 %v1151
    %v1191 = vunpack.c.l.b16 %v1152
    %v1192 = vunpack.c.l.b16 %v1153
    %v1193 = vunpack.c.l.b16 %v1154
    %v1194 = vunpack.c.l.b16 %v1155
    %v1195 = vunpack.c.l.b16 %v1156
    %v1196 = vunpack.c.l.b16 %v1157
    %v1197 = vunpack.c.l.b16 %v1158
    %v1198 = vunpack.c.l.b16 %v1159
    %v1199 = vunpack.c.l.b16 %v1160
    %v1200 = vunpack.c.l.b16 %v1161
    %v1201 = vunpack.c.l.b16 %v1162
    %v1202 = vpack.c.b16 %v1187, %v1186
    %v1203 = vpack.c.b16 %v1189, %v1188
    %v1204 = vpack.c.b16 %v1191, %v1190
    %v1205 = vpack.c.b16 %v1193, %v1192
    %v1206 = vpack.c.b16 %v1195, %v1194
    %v1207 = vpack.c.b16 %v1197, %v1196
    %v1208 = vpack.c.b16 %v1199, %v1198
    %v1209 = vpack.c.b16 %v1201, %v1200
    %1218 = vmatprep.subr.bf16.mxu0 0
    %1219 = vmatpush1.bf16.msra.mxu0 %v1202
    %1220 = vmatprep.subr.bf16.mxu0 0
    %1221 = vmatpush1.bf16.msra.mxu0 %v1203
    %1222 = vmatprep.subr.bf16.mxu0 0
    %1223 = vmatpush1.bf16.msra.mxu0 %v1204
    %1224 = vmatprep.subr.bf16.mxu0 0
    %1225 = vmatpush1.bf16.msra.mxu0 %v1205
    %1226 = vmatprep.subr.bf16.mxu0 0
    %1227 = vmatpush1.bf16.msra.mxu0 %v1206
    %1228 = vmatprep.subr.bf16.mxu0 0
    %1229 = vmatpush1.bf16.msra.mxu0 %v1207
    %1230 = vmatprep.subr.bf16.mxu0 0
    %1231 = vmatpush1.bf16.msra.mxu0 %v1208
    %1232 = vmatprep.subr.bf16.mxu0 0
    %1233 = vmatpush1.bf16.msra.mxu0 %v1209
    %1234 = vmatprep.subr.bf16.mxu0 0
    %1235 = vmatpush1.bf16.msra.mxu0 0
    %1236 = vmatprep.subr.bf16.mxu0 0
    %1237 = vmatpush1.bf16.msra.mxu0 0
    %1238 = vmatprep.subr.bf16.mxu0 0
    %1239 = vmatpush1.bf16.msra.mxu0 0
    %1240 = vmatprep.subr.bf16.mxu0 0
    %1241 = vmatpush1.bf16.msra.mxu0 0
    %1242 = vmatprep.subr.bf16.mxu0 0
    %1243 = vmatpush1.bf16.msra.mxu0 0
    %1244 = vmatprep.subr.bf16.mxu0 0
    %1245 = vmatpush1.bf16.msra.mxu0 0
    %1246 = vmatprep.subr.bf16.mxu0 0
    %1247 = vmatpush1.bf16.msra.mxu0 0
    %1248 = vmatprep.subr.bf16.mxu0 0
    %1249 = vmatpush1.bf16.msra.mxu0 0
    %1250 = vmatprep.mubr.bf16.mxu0 0
    %1251 = vmatmul.mubr.bf16.gmra.mrb[0].mxu0 %v1146
    %v1252 = vpop.f32.mrb[0].mxu0
    %v1253 = vadd.f32 %v1168, %v1252
    %v1254 = vpop.f32.mrb[0].mxu0
    %v1255 = vpop.f32.mrb[0].mxu0
    %v1256 = vpop.f32.mrb[0].mxu0
    %1257 = vdwg.mxu0
    %v1258 = vpack.c.bf16 %v1253, %v1253
    %v1259 = vld [vmem:[%s7] sm:$0xf]
    %v1260 = vld [vmem:[%s7 + $0x4] sm:$0xf]
    %v1261 = vld [vmem:[%s7 + $0x8] sm:$0xf]
    %v1262 = vld [vmem:[%s7 + $0xc] sm:$0xf]
    %v1263 = vld [vmem:[%s7 + $0x10] sm:$0xf]
    %v1264 = vld [vmem:[%s7 + $0x14] sm:$0xf]
    %v1265 = vld [vmem:[%s7 + $0x18] sm:$0xf]
    %v1266 = vld [vmem:[%s7 + $0x1c] sm:$0xf]
    %v1267 = vld [vmem:[%s7 + $0x20] sm:$0xf]
    %v1268 = vld [vmem:[%s7 + $0x24] sm:$0xf]
    %v1269 = vld [vmem:[%s7 + $0x28] sm:$0xf]
    %v1270 = vld [vmem:[%s7 + $0x2c] sm:$0xf]
    %v1271 = vld [vmem:[%s7 + $0x30] sm:$0xf]
    %v1272 = vld [vmem:[%s7 + $0x34] sm:$0xf]
    %v1273 = vld [vmem:[%s7 + $0x38] sm:$0xf]
    %v1274 = vld [vmem:[%s7 + $0x3c] sm:$0xf]
    %v1275 = vld [vmem:[%s8] sm:$0x1]
    %v1277 = vlaneseq
    %v1278 = vshrl.u32 %v1277, 7
    %v1279 = vsub.s32 0, %v1278
    %v1280 = vrot.slane %v1275, %v1279
    %v1298 = vunpack.c.l.b16 %v1259
    %v1299 = vunpack.c.l.b16 %v1260
    %v1300 = vunpack.c.l.b16 %v1261
    %v1301 = vunpack.c.l.b16 %v1262
    %v1302 = vunpack.c.l.b16 %v1263
    %v1303 = vunpack.c.l.b16 %v1264
    %v1304 = vunpack.c.l.b16 %v1265
    %v1305 = vunpack.c.l.b16 %v1266
    %v1306 = vunpack.c.l.b16 %v1267
    %v1307 = vunpack.c.l.b16 %v1268
    %v1308 = vunpack.c.l.b16 %v1269
    %v1309 = vunpack.c.l.b16 %v1270
    %v1310 = vunpack.c.l.b16 %v1271
    %v1311 = vunpack.c.l.b16 %v1272
    %v1312 = vunpack.c.l.b16 %v1273
    %v1313 = vunpack.c.l.b16 %v1274
    %v1314 = vpack.c.b16 %v1299, %v1298
    %v1315 = vpack.c.b16 %v1301, %v1300
    %v1316 = vpack.c.b16 %v1303, %v1302
    %v1317 = vpack.c.b16 %v1305, %v1304
    %v1318 = vpack.c.b16 %v1307, %v1306
    %v1319 = vpack.c.b16 %v1309, %v1308
    %v1320 = vpack.c.b16 %v1311, %v1310
    %v1321 = vpack.c.b16 %v1313, %v1312
    %1330 = vmatprep.subr.bf16.mxu0 0
    %1331 = vmatpush1.bf16.msra.mxu0 %v1314
    %1332 = vmatprep.subr.bf16.mxu0 0
    %1333 = vmatpush1.bf16.msra.mxu0 %v1315
    %1334 = vmatprep.subr.bf16.mxu0 0
    %1335 = vmatpush1.bf16.msra.mxu0 %v1316
    %1336 = vmatprep.subr.bf16.mxu0 0
    %1337 = vmatpush1.bf16.msra.mxu0 %v1317
    %1338 = vmatprep.subr.bf16.mxu0 0
    %1339 = vmatpush1.bf16.msra.mxu0 %v1318
    %1340 = vmatprep.subr.bf16.mxu0 0
    %1341 = vmatpush1.bf16.msra.mxu0 %v1319
    %1342 = vmatprep.subr.bf16.mxu0 0
    %1343 = vmatpush1.bf16.msra.mxu0 %v1320
    %1344 = vmatprep.subr.bf16.mxu0 0
    %1345 = vmatpush1.bf16.msra.mxu0 %v1321
    %1346 = vmatprep.subr.bf16.mxu0 0
    %1347 = vmatpush1.bf16.msra.mxu0 0
    %1348 = vmatprep.subr.bf16.mxu0 0
    %1349 = vmatpush1.bf16.msra.mxu0 0
    %1350 = vmatprep.subr.bf16.mxu0 0
    %1351 = vmatpush1.bf16.msra.mxu0 0
    %1352 = vmatprep.subr.bf16.mxu0 0
    %1353 = vmatpush1.bf16.msra.mxu0 0
    %1354 = vmatprep.subr.bf16.mxu0 0
    %1355 = vmatpush1.bf16.msra.mxu0 0
    %1356 = vmatprep.subr.bf16.mxu0 0
    %1357 = vmatpush1.bf16.msra.mxu0 0
    %1358 = vmatprep.subr.bf16.mxu0 0
    %1359 = vmatpush1.bf16.msra.mxu0 0
    %1360 = vmatprep.subr.bf16.mxu0 0
    %1361 = vmatpush1.bf16.msra.mxu0 0
    %1362 = vmatprep.mubr.bf16.mxu0 0
    %1363 = vmatmul.mubr.bf16.gmra.mrb[0].mxu0 %v1258
    %v1364 = vpop.f32.mrb[0].mxu0
    %v1365 = vadd.f32 %v1280, %v1364
    %v1366 = vpop.f32.mrb[0].mxu0
    %v1367 = vpop.f32.mrb[0].mxu0
    %v1368 = vpop.f32.mrb[0].mxu0
    %1369 = vdwg.mxu0
    %v1370 = vmax.f32 %v1365, 0.0
    %v1371 = vpack.c.bf16 %v1370, %v1370
    %v1372 = vld [vmem:[%s9] sm:$0xff]
    %v1373 = vld [vmem:[%s9 + $0x8] sm:$0xff]
    %v1374 = vld [vmem:[%s9 + $0x10] sm:$0xff]
    %v1375 = vld [vmem:[%s9 + $0x18] sm:$0xff]
    %v1376 = vld [vmem:[%s9 + $0x20] sm:$0xff]
    %v1377 = vld [vmem:[%s9 + $0x28] sm:$0xff]
    %v1378 = vld [vmem:[%s9 + $0x30] sm:$0xff]
    %v1379 = vld [vmem:[%s9 + $0x38] sm:$0xff]
    %v1380 = vld [vmem:[%s9 + $0x40] sm:$0xff]
    %v1381 = vld [vmem:[%s9 + $0x48] sm:$0xff]
    %v1382 = vld [vmem:[%s9 + $0x50] sm:$0xff]
    %v1383 = vld [vmem:[%s9 + $0x58] sm:$0xff]
    %v1384 = vld [vmem:[%s9 + $0x60] sm:$0xff]
    %v1385 = vld [vmem:[%s9 + $0x68] sm:$0xff]
    %v1386 = vld [vmem:[%s9 + $0x70] sm:$0xff]
    %v1387 = vld [vmem:[%s9 + $0x78] sm:$0xff]
    %v1388 = vld [vmem:[%s10] sm:$0x3]
    %v1390 = vlaneseq
    %v1391 = vshrl.u32 %v1390, 7
    %v1392 = vsub.s32 0, %v1391
    %v1393 = vrot.slane %v1388, %v1392
    %v1394 = vlaneseq
    %v1395 = vshrl.u32 %v1394, 7
    %v1396 = vsub.s32 1, %v1395
    %v1397 = vrot.slane %v1388, %v1396
    %v1416 = vunpack.c.l.b16 %v1372
    %v1417 = vunpack.c.h.b16 %v1372
    %v1418 = vunpack.c.l.b16 %v1373
    %v1419 = vunpack.c.h.b16 %v1373
    %v1420 = vunpack.c.l.b16 %v1374
    %v1421 = vunpack.c.h.b16 %v1374
    %v1422 = vunpack.c.l.b16 %v1375
    %v1423 = vunpack.c.h.b16 %v1375
    %v1424 = vunpack.c.l.b16 %v1376
    %v1425 = vunpack.c.h.b16 %v1376
    %v1426 = vunpack.c.l.b16 %v1377
    %v1427 = vunpack.c.h.b16 %v1377
    %v1428 = vunpack.c.l.b16 %v1378
    %v1429 = vunpack.c.h.b16 %v1378
    %v1430 = vunpack.c.l.b16 %v1379
    %v1431 = vunpack.c.h.b16 %v1379
    %v1432 = vunpack.c.l.b16 %v1380
    %v1433 = vunpack.c.h.b16 %v1380
    %v1434 = vunpack.c.l.b16 %v1381
    %v1435 = vunpack.c.h.b16 %v1381
    %v1436 = vunpack.c.l.b16 %v1382
    %v1437 = vunpack.c.h.b16 %v1382
    %v1438 = vunpack.c.l.b16 %v1383
    %v1439 = vunpack.c.h.b16 %v1383
    %v1440 = vunpack.c.l.b16 %v1384
    %v1441 = vunpack.c.h.b16 %v1384
    %v1442 = vunpack.c.l.b16 %v1385
    %v1443 = vunpack.c.h.b16 %v1385
    %v1444 = vunpack.c.l.b16 %v1386
    %v1445 = vunpack.c.h.b16 %v1386
    %v1446 = vunpack.c.l.b16 %v1387
    %v1447 = vunpack.c.h.b16 %v1387
    %v1448 = vpack.c.b16 %v1418, %v1416
    %v1449 = vpack.c.b16 %v1419, %v1417
    %v1450 = vpack.c.b16 %v1422, %v1420
    %v1451 = vpack.c.b16 %v1423, %v1421
    %v1452 = vpack.c.b16 %v1426, %v1424
    %v1453 = vpack.c.b16 %v1427, %v1425
    %v1454 = vpack.c.b16 %v1430, %v1428
    %v1455 = vpack.c.b16 %v1431, %v1429
    %v1456 = vpack.c.b16 %v1434, %v1432
    %v1457 = vpack.c.b16 %v1435, %v1433
    %v1458 = vpack.c.b16 %v1438, %v1436
    %v1459 = vpack.c.b16 %v1439, %v1437
    %v1460 = vpack.c.b16 %v1442, %v1440
    %v1461 = vpack.c.b16 %v1443, %v1441
    %v1462 = vpack.c.b16 %v1446, %v1444
    %v1463 = vpack.c.b16 %v1447, %v1445
    %1480 = vmatprep.subr.bf16.mxu0 %v1449
    %1481 = vmatpush1.bf16.msra.mxu0 %v1448
    %1482 = vmatprep.subr.bf16.mxu0 %v1451
    %1483 = vmatpush1.bf16.msra.mxu0 %v1450
    %1484 = vmatprep.subr.bf16.mxu0 %v1453
    %1485 = vmatpush1.bf16.msra.mxu0 %v1452
    %1486 = vmatprep.subr.bf16.mxu0 %v1455
    %1487 = vmatpush1.bf16.msra.mxu0 %v1454
    %1488 = vmatprep.subr.bf16.mxu0 %v1457
    %1489 = vmatpush1.bf16.msra.mxu0 %v1456
    %1490 = vmatprep.subr.bf16.mxu0 %v1459
    %1491 = vmatpush1.bf16.msra.mxu0 %v1458
    %1492 = vmatprep.subr.bf16.mxu0 %v1461
    %1493 = vmatpush1.bf16.msra.mxu0 %v1460
    %1494 = vmatprep.subr.bf16.mxu0 %v1463
    %1495 = vmatpush1.bf16.msra.mxu0 %v1462
    %1496 = vmatprep.subr.bf16.mxu0 0
    %1497 = vmatpush1.bf16.msra.mxu0 0
    %1498 = vmatprep.subr.bf16.mxu0 0
    %1499 = vmatpush1.bf16.msra.mxu0 0
    %1500 = vmatprep.subr.bf16.mxu0 0
    %1501 = vmatpush1.bf16.msra.mxu0 0
    %1502 = vmatprep.subr.bf16.mxu0 0
    %1503 = vmatpush1.bf16.msra.mxu0 0
    %1504 = vmatprep.subr.bf16.mxu0 0
    %1505 = vmatpush1.bf16.msra.mxu0 0
    %1506 = vmatprep.subr.bf16.mxu0 0
    %1507 = vmatpush1.bf16.msra.mxu0 0
    %1508 = vmatprep.subr.bf16.mxu0 0
    %1509 = vmatpush1.bf16.msra.mxu0 0
    %1510 = vmatprep.subr.bf16.mxu0 0
    %1511 = vmatpush1.bf16.msra.mxu0 0
    %1512 = vmatprep.mubr.bf16.mxu0 0
    %1513 = vmatmul.mubr.bf16.gmra.mrb[0].mxu0 %v1371
    %v1514 = vpop.f32.mrb[0].mxu0
    %v1515 = vadd.f32 %v1393, %v1514
    %v1516 = vpop.f32.mrb[0].mxu0
    %v1517 = vadd.f32 %v1397, %v1516
    %v1518 = vpop.f32.mrb[0].mxu0
    %v1519 = vpop.f32.mrb[0].mxu0
    %1520 = vdwg.mxu0
    %v1521 = vmax.f32 %v1515, 0.0
    %v1522 = vmax.f32 %v1517, 0.0
    %v1523 = vpack.c.bf16 %v1521, %v1521
    %v1524 = vpack.c.bf16 %v1522, %v1522
    %v1525 = vld [vmem:[%s11] sm:$0xff]
    %v1526 = vld [vmem:[%s11 + $0x8] sm:$0xff]
    %v1527 = vld [vmem:[%s11 + $0x10] sm:$0xff]
    %v1528 = vld [vmem:[%s11 + $0x18] sm:$0xff]
    %v1529 = vld [vmem:[%s11 + $0x20] sm:$0xff]
    %v1530 = vld [vmem:[%s11 + $0x28] sm:$0xff]
    %v1531 = vld [vmem:[%s11 + $0x30] sm:$0xff]
    %v1532 = vld [vmem:[%s11 + $0x38] sm:$0xff]
    %v1533 = vld [vmem:[%s11 + $0x40] sm:$0xff]
    %v1534 = vld [vmem:[%s11 + $0x48] sm:$0xff]
    %v1535 = vld [vmem:[%s11 + $0x50] sm:$0xff]
    %v1536 = vld [vmem:[%s11 + $0x58] sm:$0xff]
    %v1537 = vld [vmem:[%s11 + $0x60] sm:$0xff]
    %v1538 = vld [vmem:[%s11 + $0x68] sm:$0xff]
    %v1539 = vld [vmem:[%s11 + $0x70] sm:$0xff]
    %v1540 = vld [vmem:[%s11 + $0x78] sm:$0xff]
    %v1541 = vld [vmem:[%s11 + $0x80] sm:$0xff]
    %v1542 = vld [vmem:[%s11 + $0x88] sm:$0xff]
    %v1543 = vld [vmem:[%s11 + $0x90] sm:$0xff]
    %v1544 = vld [vmem:[%s11 + $0x98] sm:$0xff]
    %v1545 = vld [vmem:[%s11 + $0xa0] sm:$0xff]
    %v1546 = vld [vmem:[%s11 + $0xa8] sm:$0xff]
    %v1547 = vld [vmem:[%s11 + $0xb0] sm:$0xff]
    %v1548 = vld [vmem:[%s11 + $0xb8] sm:$0xff]
    %v1549 = vld [vmem:[%s11 + $0xc0] sm:$0xff]
    %v1550 = vld [vmem:[%s11 + $0xc8] sm:$0xff]
    %v1551 = vld [vmem:[%s11 + $0xd0] sm:$0xff]
    %v1552 = vld [vmem:[%s11 + $0xd8] sm:$0xff]
    %v1553 = vld [vmem:[%s11 + $0xe0] sm:$0xff]
    %v1554 = vld [vmem:[%s11 + $0xe8] sm:$0xff]
    %v1555 = vld [vmem:[%s11 + $0xf0] sm:$0xff]
    %v1556 = vld [vmem:[%s11 + $0xf8] sm:$0xff]
    %v1557 = vld [vmem:[%s11 + $0x100] sm:$0xff]
    %v1558 = vld [vmem:[%s11 + $0x108] sm:$0xff]
    %v1559 = vld [vmem:[%s11 + $0x110] sm:$0xff]
    %v1560 = vld [vmem:[%s11 + $0x118] sm:$0xff]
    %v1561 = vld [vmem:[%s11 + $0x120] sm:$0xff]
    %v1562 = vld [vmem:[%s11 + $0x128] sm:$0xff]
    %v1563 = vld [vmem:[%s11 + $0x130] sm:$0xff]
    %v1564 = vld [vmem:[%s11 + $0x138] sm:$0xff]
    %v1565 = vld [vmem:[%s11 + $0x140] sm:$0xff]
    %v1566 = vld [vmem:[%s11 + $0x148] sm:$0xff]
    %v1567 = vld [vmem:[%s11 + $0x150] sm:$0xff]
    %v1568 = vld [vmem:[%s11 + $0x158] sm:$0xff]
    %v1569 = vld [vmem:[%s11 + $0x160] sm:$0xff]
    %v1570 = vld [vmem:[%s11 + $0x168] sm:$0xff]
    %v1571 = vld [vmem:[%s11 + $0x170] sm:$0xff]
    %v1572 = vld [vmem:[%s11 + $0x178] sm:$0xff]
    %v1573 = vld [vmem:[%s11 + $0x180] sm:$0xff]
    %v1574 = vld [vmem:[%s11 + $0x188] sm:$0xff]
    %v1575 = vld [vmem:[%s11 + $0x190] sm:$0xff]
    %v1576 = vld [vmem:[%s11 + $0x198] sm:$0xff]
    %v1577 = vld [vmem:[%s11 + $0x1a0] sm:$0xff]
    %v1578 = vld [vmem:[%s11 + $0x1a8] sm:$0xff]
    %v1579 = vld [vmem:[%s11 + $0x1b0] sm:$0xff]
    %v1580 = vld [vmem:[%s11 + $0x1b8] sm:$0xff]
    %v1581 = vld [vmem:[%s11 + $0x1c0] sm:$0xff]
    %v1582 = vld [vmem:[%s11 + $0x1c8] sm:$0xff]
    %v1583 = vld [vmem:[%s11 + $0x1d0] sm:$0xff]
    %v1584 = vld [vmem:[%s11 + $0x1d8] sm:$0xff]
    %v1585 = vld [vmem:[%s11 + $0x1e0] sm:$0xff]
    %v1586 = vld [vmem:[%s11 + $0x1e8] sm:$0xff]
    %v1587 = vld [vmem:[%s11 + $0x1f0] sm:$0xff]
    %v1588 = vld [vmem:[%s11 + $0x1f8] sm:$0xff]
    %v1589 = vld [vmem:[%s11 + $0x200] sm:$0xff]
    %v1590 = vld [vmem:[%s11 + $0x208] sm:$0xff]
    %v1591 = vld [vmem:[%s11 + $0x210] sm:$0xff]
    %v1592 = vld [vmem:[%s11 + $0x218] sm:$0xff]
    %v1593 = vld [vmem:[%s11 + $0x220] sm:$0xff]
    %v1594 = vld [vmem:[%s11 + $0x228] sm:$0xff]
    %v1595 = vld [vmem:[%s11 + $0x230] sm:$0xff]
    %v1596 = vld [vmem:[%s11 + $0x238] sm:$0xff]
    %v1597 = vld [vmem:[%s11 + $0x240] sm:$0xff]
    %v1598 = vld [vmem:[%s11 + $0x248] sm:$0xff]
    %v1599 = vld [vmem:[%s11 + $0x250] sm:$0xff]
    %v1600 = vld [vmem:[%s11 + $0x258] sm:$0xff]
    %v1601 = vld [vmem:[%s11 + $0x260] sm:$0xff]
    %v1602 = vld [vmem:[%s11 + $0x268] sm:$0xff]
    %v1603 = vld [vmem:[%s11 + $0x270] sm:$0xff]
    %v1604 = vld [vmem:[%s11 + $0x278] sm:$0xff]
    %v1605 = vld [vmem:[%s11 + $0x280] sm:$0xff]
    %v1606 = vld [vmem:[%s11 + $0x288] sm:$0xff]
    %v1607 = vld [vmem:[%s11 + $0x290] sm:$0xff]
    %v1608 = vld [vmem:[%s11 + $0x298] sm:$0xff]
    %v1609 = vld [vmem:[%s11 + $0x2a0] sm:$0xff]
    %v1610 = vld [vmem:[%s11 + $0x2a8] sm:$0xff]
    %v1611 = vld [vmem:[%s11 + $0x2b0] sm:$0xff]
    %v1612 = vld [vmem:[%s11 + $0x2b8] sm:$0xff]
    %v1613 = vld [vmem:[%s11 + $0x2c0] sm:$0xff]
    %v1614 = vld [vmem:[%s11 + $0x2c8] sm:$0xff]
    %v1615 = vld [vmem:[%s11 + $0x2d0] sm:$0xff]
    %v1616 = vld [vmem:[%s11 + $0x2d8] sm:$0xff]
    %v1617 = vld [vmem:[%s11 + $0x2e0] sm:$0xff]
    %v1618 = vld [vmem:[%s11 + $0x2e8] sm:$0xff]
    %v1619 = vld [vmem:[%s11 + $0x2f0] sm:$0xff]
    %v1620 = vld [vmem:[%s11 + $0x2f8] sm:$0xff]
    %v1621 = vld [vmem:[%s11 + $0x300] sm:$0xff]
    %v1622 = vld [vmem:[%s11 + $0x308] sm:$0xff]
    %v1623 = vld [vmem:[%s11 + $0x310] sm:$0xff]
    %v1624 = vld [vmem:[%s11 + $0x318] sm:$0xff]
    %v1625 = vld [vmem:[%s11 + $0x320] sm:$0xff]
    %v1626 = vld [vmem:[%s11 + $0x328] sm:$0xff]
    %v1627 = vld [vmem:[%s11 + $0x330] sm:$0xff]
    %v1628 = vld [vmem:[%s11 + $0x338] sm:$0xff]
    %v1629 = vld [vmem:[%s11 + $0x340] sm:$0xff]
    %v1630 = vld [vmem:[%s11 + $0x348] sm:$0xff]
    %v1631 = vld [vmem:[%s11 + $0x350] sm:$0xff]
    %v1632 = vld [vmem:[%s11 + $0x358] sm:$0xff]
    %v1633 = vld [vmem:[%s11 + $0x360] sm:$0xff]
    %v1634 = vld [vmem:[%s11 + $0x368] sm:$0xff]
    %v1635 = vld [vmem:[%s11 + $0x370] sm:$0xff]
    %v1636 = vld [vmem:[%s11 + $0x378] sm:$0xff]
    %v1637 = vld [vmem:[%s11 + $0x380] sm:$0xff]
    %v1638 = vld [vmem:[%s11 + $0x388] sm:$0xff]
    %v1639 = vld [vmem:[%s11 + $0x390] sm:$0xff]
    %v1640 = vld [vmem:[%s11 + $0x398] sm:$0xff]
    %v1641 = vld [vmem:[%s11 + $0x3a0] sm:$0xff]
    %v1642 = vld [vmem:[%s11 + $0x3a8] sm:$0xff]
    %v1643 = vld [vmem:[%s11 + $0x3b0] sm:$0xff]
    %v1644 = vld [vmem:[%s11 + $0x3b8] sm:$0xff]
    %v1645 = vld [vmem:[%s11 + $0x3c0] sm:$0xff]
    %v1646 = vld [vmem:[%s11 + $0x3c8] sm:$0xff]
    %v1647 = vld [vmem:[%s11 + $0x3d0] sm:$0xff]
    %v1648 = vld [vmem:[%s11 + $0x3d8] sm:$0xff]
    %v1649 = vld [vmem:[%s11 + $0x3e0] sm:$0xff]
    %v1650 = vld [vmem:[%s11 + $0x3e8] sm:$0xff]
    %v1651 = vld [vmem:[%s11 + $0x3f0] sm:$0xff]
    %v1652 = vld [vmem:[%s11 + $0x3f8] sm:$0xff]
    %v1653 = vld [vmem:[%s12] sm:$0xff]
    %v1655 = vlaneseq
    %v1656 = vshrl.u32 %v1655, 7
    %v1657 = vsub.s32 0, %v1656
    %v1658 = vrot.slane %v1653, %v1657
    %v1659 = vlaneseq
    %v1660 = vshrl.u32 %v1659, 7
    %v1661 = vsub.s32 1, %v1660
    %v1662 = vrot.slane %v1653, %v1661
    %v1663 = vlaneseq
    %v1664 = vshrl.u32 %v1663, 7
    %v1665 = vsub.s32 2, %v1664
    %v1666 = vrot.slane %v1653, %v1665
    %v1667 = vlaneseq
    %v1668 = vshrl.u32 %v1667, 7
    %v1669 = vsub.s32 3, %v1668
    %v1670 = vrot.slane %v1653, %v1669
    %v1671 = vlaneseq
    %v1672 = vshrl.u32 %v1671, 7
    %v1673 = vsub.s32 4, %v1672
    %v1674 = vrot.slane %v1653, %v1673
    %v1675 = vlaneseq
    %v1676 = vshrl.u32 %v1675, 7
    %v1677 = vsub.s32 5, %v1676
    %v1678 = vrot.slane %v1653, %v1677
    %v1679 = vlaneseq
    %v1680 = vshrl.u32 %v1679, 7
    %v1681 = vsub.s32 6, %v1680
    %v1682 = vrot.slane %v1653, %v1681
    %v1683 = vlaneseq
    %v1684 = vshrl.u32 %v1683, 7
    %v1685 = vsub.s32 7, %v1684
    %v1686 = vrot.slane %v1653, %v1685
    %v1823 = vunpack.c.l.b16 %v1525
    %v1824 = vunpack.c.h.b16 %v1525
    %v1825 = vunpack.c.l.b16 %v1526
    %v1826 = vunpack.c.h.b16 %v1526
    %v1827 = vunpack.c.l.b16 %v1527
    %v1828 = vunpack.c.h.b16 %v1527
    %v1829 = vunpack.c.l.b16 %v1528
    %v1830 = vunpack.c.h.b16 %v1528
    %v1831 = vunpack.c.l.b16 %v1529
    %v1832 = vunpack.c.h.b16 %v1529
    %v1833 = vunpack.c.l.b16 %v1530
    %v1834 = vunpack.c.h.b16 %v1530
    %v1835 = vunpack.c.l.b16 %v1531
    %v1836 = vunpack.c.h.b16 %v1531
    %v1837 = vunpack.c.l.b16 %v1532
    %v1838 = vunpack.c.h.b16 %v1532
    %v1839 = vunpack.c.l.b16 %v1533
    %v1840 = vunpack.c.h.b16 %v1533
    %v1841 = vunpack.c.l.b16 %v1534
    %v1842 = vunpack.c.h.b16 %v1534
    %v1843 = vunpack.c.l.b16 %v1535
    %v1844 = vunpack.c.h.b16 %v1535
    %v1845 = vunpack.c.l.b16 %v1536
    %v1846 = vunpack.c.h.b16 %v1536
    %v1847 = vunpack.c.l.b16 %v1537
    %v1848 = vunpack.c.h.b16 %v1537
    %v1849 = vunpack.c.l.b16 %v1538
    %v1850 = vunpack.c.h.b16 %v1538
    %v1851 = vunpack.c.l.b16 %v1539
    %v1852 = vunpack.c.h.b16 %v1539
    %v1853 = vunpack.c.l.b16 %v1540
    %v1854 = vunpack.c.h.b16 %v1540
    %v1855 = vunpack.c.l.b16 %v1541
    %v1856 = vunpack.c.h.b16 %v1541
    %v1857 = vunpack.c.l.b16 %v1542
    %v1858 = vunpack.c.h.b16 %v1542
    %v1859 = vunpack.c.l.b16 %v1543
    %v1860 = vunpack.c.h.b16 %v1543
    %v1861 = vunpack.c.l.b16 %v1544
    %v1862 = vunpack.c.h.b16 %v1544
    %v1863 = vunpack.c.l.b16 %v1545
    %v1864 = vunpack.c.h.b16 %v1545
    %v1865 = vunpack.c.l.b16 %v1546
    %v1866 = vunpack.c.h.b16 %v1546
    %v1867 = vunpack.c.l.b16 %v1547
    %v1868 = vunpack.c.h.b16 %v1547
    %v1869 = vunpack.c.l.b16 %v1548
    %v1870 = vunpack.c.h.b16 %v1548
    %v1871 = vunpack.c.l.b16 %v1549
    %v1872 = vunpack.c.h.b16 %v1549
    %v1873 = vunpack.c.l.b16 %v1550
    %v1874 = vunpack.c.h.b16 %v1550
    %v1875 = vunpack.c.l.b16 %v1551
    %v1876 = vunpack.c.h.b16 %v1551
    %v1877 = vunpack.c.l.b16 %v1552
    %v1878 = vunpack.c.h.b16 %v1552
    %v1879 = vunpack.c.l.b16 %v1553
    %v1880 = vunpack.c.h.b16 %v1553
    %v1881 = vunpack.c.l.b16 %v1554
    %v1882 = vunpack.c.h.b16 %v1554
    %v1883 = vunpack.c.l.b16 %v1555
    %v1884 = vunpack.c.h.b16 %v1555
    %v1885 = vunpack.c.l.b16 %v1556
    %v1886 = vunpack.c.h.b16 %v1556
    %v1887 = vunpack.c.l.b16 %v1557
    %v1888 = vunpack.c.h.b16 %v1557
    %v1889 = vunpack.c.l.b16 %v1558
    %v1890 = vunpack.c.h.b16 %v1558
    %v1891 = vunpack.c.l.b16 %v1559
    %v1892 = vunpack.c.h.b16 %v1559
    %v1893 = vunpack.c.l.b16 %v1560
    %v1894 = vunpack.c.h.b16 %v1560
    %v1895 = vunpack.c.l.b16 %v1561
    %v1896 = vunpack.c.h.b16 %v1561
    %v1897 = vunpack.c.l.b16 %v1562
    %v1898 = vunpack.c.h.b16 %v1562
    %v1899 = vunpack.c.l.b16 %v1563
    %v1900 = vunpack.c.h.b16 %v1563
    %v1901 = vunpack.c.l.b16 %v1564
    %v1902 = vunpack.c.h.b16 %v1564
    %v1903 = vunpack.c.l.b16 %v1565
    %v1904 = vunpack.c.h.b16 %v1565
    %v1905 = vunpack.c.l.b16 %v1566
    %v1906 = vunpack.c.h.b16 %v1566
    %v1907 = vunpack.c.l.b16 %v1567
    %v1908 = vunpack.c.h.b16 %v1567
    %v1909 = vunpack.c.l.b16 %v1568
    %v1910 = vunpack.c.h.b16 %v1568
    %v1911 = vunpack.c.l.b16 %v1569
    %v1912 = vunpack.c.h.b16 %v1569
    %v1913 = vunpack.c.l.b16 %v1570
    %v1914 = vunpack.c.h.b16 %v1570
    %v1915 = vunpack.c.l.b16 %v1571
    %v1916 = vunpack.c.h.b16 %v1571
    %v1917 = vunpack.c.l.b16 %v1572
    %v1918 = vunpack.c.h.b16 %v1572
    %v1919 = vunpack.c.l.b16 %v1573
    %v1920 = vunpack.c.h.b16 %v1573
    %v1921 = vunpack.c.l.b16 %v1574
    %v1922 = vunpack.c.h.b16 %v1574
    %v1923 = vunpack.c.l.b16 %v1575
    %v1924 = vunpack.c.h.b16 %v1575
    %v1925 = vunpack.c.l.b16 %v1576
    %v1926 = vunpack.c.h.b16 %v1576
    %v1927 = vunpack.c.l.b16 %v1577
    %v1928 = vunpack.c.h.b16 %v1577
    %v1929 = vunpack.c.l.b16 %v1578
    %v1930 = vunpack.c.h.b16 %v1578
    %v1931 = vunpack.c.l.b16 %v1579
    %v1932 = vunpack.c.h.b16 %v1579
    %v1933 = vunpack.c.l.b16 %v1580
    %v1934 = vunpack.c.h.b16 %v1580
    %v1935 = vunpack.c.l.b16 %v1581
    %v1936 = vunpack.c.h.b16 %v1581
    %v1937 = vunpack.c.l.b16 %v1582
    %v1938 = vunpack.c.h.b16 %v1582
    %v1939 = vunpack.c.l.b16 %v1583
    %v1940 = vunpack.c.h.b16 %v1583
    %v1941 = vunpack.c.l.b16 %v1584
    %v1942 = vunpack.c.h.b16 %v1584
    %v1943 = vunpack.c.l.b16 %v1585
    %v1944 = vunpack.c.h.b16 %v1585
    %v1945 = vunpack.c.l.b16 %v1586
    %v1946 = vunpack.c.h.b16 %v1586
    %v1947 = vunpack.c.l.b16 %v1587
    %v1948 = vunpack.c.h.b16 %v1587
    %v1949 = vunpack.c.l.b16 %v1588
    %v1950 = vunpack.c.h.b16 %v1588
    %v1951 = vunpack.c.l.b16 %v1589
    %v1952 = vunpack.c.h.b16 %v1589
    %v1953 = vunpack.c.l.b16 %v1590
    %v1954 = vunpack.c.h.b16 %v1590
    %v1955 = vunpack.c.l.b16 %v1591
    %v1956 = vunpack.c.h.b16 %v1591
    %v1957 = vunpack.c.l.b16 %v1592
    %v1958 = vunpack.c.h.b16 %v1592
    %v1959 = vunpack.c.l.b16 %v1593
    %v1960 = vunpack.c.h.b16 %v1593
    %v1961 = vunpack.c.l.b16 %v1594
    %v1962 = vunpack.c.h.b16 %v1594
    %v1963 = vunpack.c.l.b16 %v1595
    %v1964 = vunpack.c.h.b16 %v1595
    %v1965 = vunpack.c.l.b16 %v1596
    %v1966 = vunpack.c.h.b16 %v1596
    %v1967 = vunpack.c.l.b16 %v1597
    %v1968 = vunpack.c.h.b16 %v1597
    %v1969 = vunpack.c.l.b16 %v1598
    %v1970 = vunpack.c.h.b16 %v1598
    %v1971 = vunpack.c.l.b16 %v1599
    %v1972 = vunpack.c.h.b16 %v1599
    %v1973 = vunpack.c.l.b16 %v1600
    %v1974 = vunpack.c.h.b16 %v1600
    %v1975 = vunpack.c.l.b16 %v1601
    %v1976 = vunpack.c.h.b16 %v1601
    %v1977 = vunpack.c.l.b16 %v1602
    %v1978 = vunpack.c.h.b16 %v1602
    %v1979 = vunpack.c.l.b16 %v1603
    %v1980 = vunpack.c.h.b16 %v1603
    %v1981 = vunpack.c.l.b16 %v1604
    %v1982 = vunpack.c.h.b16 %v1604
    %v1983 = vunpack.c.l.b16 %v1605
    %v1984 = vunpack.c.h.b16 %v1605
    %v1985 = vunpack.c.l.b16 %v1606
    %v1986 = vunpack.c.h.b16 %v1606
    %v1987 = vunpack.c.l.b16 %v1607
    %v1988 = vunpack.c.h.b16 %v1607
    %v1989 = vunpack.c.l.b16 %v1608
    %v1990 = vunpack.c.h.b16 %v1608
    %v1991 = vunpack.c.l.b16 %v1609
    %v1992 = vunpack.c.h.b16 %v1609
    %v1993 = vunpack.c.l.b16 %v1610
    %v1994 = vunpack.c.h.b16 %v1610
    %v1995 = vunpack.c.l.b16 %v1611
    %v1996 = vunpack.c.h.b16 %v1611
    %v1997 = vunpack.c.l.b16 %v1612
    %v1998 = vunpack.c.h.b16 %v1612
    %v1999 = vunpack.c.l.b16 %v1613
    %v2000 = vunpack.c.h.b16 %v1613
    %v2001 = vunpack.c.l.b16 %v1614
    %v2002 = vunpack.c.h.b16 %v1614
    %v2003 = vunpack.c.l.b16 %v1615
    %v2004 = vunpack.c.h.b16 %v1615
    %v2005 = vunpack.c.l.b16 %v1616
    %v2006 = vunpack.c.h.b16 %v1616
    %v2007 = vunpack.c.l.b16 %v1617
    %v2008 = vunpack.c.h.b16 %v1617
    %v2009 = vunpack.c.l.b16 %v1618
    %v2010 = vunpack.c.h.b16 %v1618
    %v2011 = vunpack.c.l.b16 %v1619
    %v2012 = vunpack.c.h.b16 %v1619
    %v2013 = vunpack.c.l.b16 %v1620
    %v2014 = vunpack.c.h.b16 %v1620
    %v2015 = vunpack.c.l.b16 %v1621
    %v2016 = vunpack.c.h.b16 %v1621
    %v2017 = vunpack.c.l.b16 %v1622
    %v2018 = vunpack.c.h.b16 %v1622
    %v2019 = vunpack.c.l.b16 %v1623
    %v2020 = vunpack.c.h.b16 %v1623
    %v2021 = vunpack.c.l.b16 %v1624
    %v2022 = vunpack.c.h.b16 %v1624
    %v2023 = vunpack.c.l.b16 %v1625
    %v2024 = vunpack.c.h.b16 %v1625
    %v2025 = vunpack.c.l.b16 %v1626
    %v2026 = vunpack.c.h.b16 %v1626
    %v2027 = vunpack.c.l.b16 %v1627
    %v2028 = vunpack.c.h.b16 %v1627
    %v2029 = vunpack.c.l.b16 %v1628
    %v2030 = vunpack.c.h.b16 %v1628
    %v2031 = vunpack.c.l.b16 %v1629
    %v2032 = vunpack.c.h.b16 %v1629
    %v2033 = vunpack.c.l.b16 %v1630
    %v2034 = vunpack.c.h.b16 %v1630
    %v2035 = vunpack.c.l.b16 %v1631
    %v2036 = vunpack.c.h.b16 %v1631
    %v2037 = vunpack.c.l.b16 %v1632
    %v2038 = vunpack.c.h.b16 %v1632
    %v2039 = vunpack.c.l.b16 %v1633
    %v2040 = vunpack.c.h.b16 %v1633
    %v2041 = vunpack.c.l.b16 %v1634
    %v2042 = vunpack.c.h.b16 %v1634
    %v2043 = vunpack.c.l.b16 %v1635
    %v2044 = vunpack.c.h.b16 %v1635
    %v2045 = vunpack.c.l.b16 %v1636
    %v2046 = vunpack.c.h.b16 %v1636
    %v2047 = vunpack.c.l.b16 %v1637
    %v2048 = vunpack.c.h.b16 %v1637
    %v2049 = vunpack.c.l.b16 %v1638
    %v2050 = vunpack.c.h.b16 %v1638
    %v2051 = vunpack.c.l.b16 %v1639
    %v2052 = vunpack.c.h.b16 %v1639
    %v2053 = vunpack.c.l.b16 %v1640
    %v2054 = vunpack.c.h.b16 %v1640
    %v2055 = vunpack.c.l.b16 %v1641
    %v2056 = vunpack.c.h.b16 %v1641
    %v2057 = vunpack.c.l.b16 %v1642
    %v2058 = vunpack.c.h.b16 %v1642
    %v2059 = vunpack.c.l.b16 %v1643
    %v2060 = vunpack.c.h.b16 %v1643
    %v2061 = vunpack.c.l.b16 %v1644
    %v2062 = vunpack.c.h.b16 %v1644
    %v2063 = vunpack.c.l.b16 %v1645
    %v2064 = vunpack.c.h.b16 %v1645
    %v2065 = vunpack.c.l.b16 %v1646
    %v2066 = vunpack.c.h.b16 %v1646
    %v2067 = vunpack.c.l.b16 %v1647
    %v2068 = vunpack.c.h.b16 %v1647
    %v2069 = vunpack.c.l.b16 %v1648
    %v2070 = vunpack.c.h.b16 %v1648
    %v2071 = vunpack.c.l.b16 %v1649
    %v2072 = vunpack.c.h.b16 %v1649
    %v2073 = vunpack.c.l.b16 %v1650
    %v2074 = vunpack.c.h.b16 %v1650
    %v2075 = vunpack.c.l.b16 %v1651
    %v2076 = vunpack.c.h.b16 %v1651
    %v2077 = vunpack.c.l.b16 %v1652
    %v2078 = vunpack.c.h.b16 %v1652
    %v2079 = vpack.c.b16 %v1831, %v1823
    %v2080 = vpack.c.b16 %v1832, %v1824
    %v2081 = vpack.c.b16 %v1833, %v1825
    %v2082 = vpack.c.b16 %v1834, %v1826
    %v2083 = vpack.c.b16 %v1835, %v1827
    %v2084 = vpack.c.b16 %v1836, %v1828
    %v2085 = vpack.c.b16 %v1837, %v1829
    %v2086 = vpack.c.b16 %v1838, %v1830
    %v2087 = vpack.c.b16 %v1847, %v1839
    %v2088 = vpack.c.b16 %v1848, %v1840
    %v2089 = vpack.c.b16 %v1849, %v1841
    %v2090 = vpack.c.b16 %v1850, %v1842
    %v2091 = vpack.c.b16 %v1851, %v1843
    %v2092 = vpack.c.b16 %v1852, %v1844
    %v2093 = vpack.c.b16 %v1853, %v1845
    %v2094 = vpack.c.b16 %v1854, %v1846
    %v2095 = vpack.c.b16 %v1863, %v1855
    %v2096 = vpack.c.b16 %v1864, %v1856
    %v2097 = vpack.c.b16 %v1865, %v1857
    %v2098 = vpack.c.b16 %v1866, %v1858
    %v2099 = vpack.c.b16 %v1867, %v1859
    %v2100 = vpack.c.b16 %v1868, %v1860
    %v2101 = vpack.c.b16 %v1869, %v1861
    %v2102 = vpack.c.b16 %v1870, %v1862
    %v2103 = vpack.c.b16 %v1879, %v1871
    %v2104 = vpack.c.b16 %v1880, %v1872
    %v2105 = vpack.c.b16 %v1881, %v1873
    %v2106 = vpack.c.b16 %v1882, %v1874
    %v2107 = vpack.c.b16 %v1883, %v1875
    %v2108 = vpack.c.b16 %v1884, %v1876
    %v2109 = vpack.c.b16 %v1885, %v1877
    %v2110 = vpack.c.b16 %v1886, %v1878
    %v2111 = vpack.c.b16 %v1895, %v1887
    %v2112 = vpack.c.b16 %v1896, %v1888
    %v2113 = vpack.c.b16 %v1897, %v1889
    %v2114 = vpack.c.b16 %v1898, %v1890
    %v2115 = vpack.c.b16 %v1899, %v1891
    %v2116 = vpack.c.b16 %v1900, %v1892
    %v2117 = vpack.c.b16 %v1901, %v1893
    %v2118 = vpack.c.b16 %v1902, %v1894
    %v2119 = vpack.c.b16 %v1911, %v1903
    %v2120 = vpack.c.b16 %v1912, %v1904
    %v2121 = vpack.c.b16 %v1913, %v1905
    %v2122 = vpack.c.b16 %v1914, %v1906
    %v2123 = vpack.c.b16 %v1915, %v1907
    %v2124 = vpack.c.b16 %v1916, %v1908
    %v2125 = vpack.c.b16 %v1917, %v1909
    %v2126 = vpack.c.b16 %v1918, %v1910
    %v2127 = vpack.c.b16 %v1927, %v1919
    %v2128 = vpack.c.b16 %v1928, %v1920
    %v2129 = vpack.c.b16 %v1929, %v1921
    %v2130 = vpack.c.b16 %v1930, %v1922
    %v2131 = vpack.c.b16 %v1931, %v1923
    %v2132 = vpack.c.b16 %v1932, %v1924
    %v2133 = vpack.c.b16 %v1933, %v1925
    %v2134 = vpack.c.b16 %v1934, %v1926
    %v2135 = vpack.c.b16 %v1943, %v1935
    %v2136 = vpack.c.b16 %v1944, %v1936
    %v2137 = vpack.c.b16 %v1945, %v1937
    %v2138 = vpack.c.b16 %v1946, %v1938
    %v2139 = vpack.c.b16 %v1947, %v1939
    %v2140 = vpack.c.b16 %v1948, %v1940
    %v2141 = vpack.c.b16 %v1949, %v1941
    %v2142 = vpack.c.b16 %v1950, %v1942
    %v2143 = vpack.c.b16 %v1959, %v1951
    %v2144 = vpack.c.b16 %v1960, %v1952
    %v2145 = vpack.c.b16 %v1961, %v1953
    %v2146 = vpack.c.b16 %v1962, %v1954
    %v2147 = vpack.c.b16 %v1963, %v1955
    %v2148 = vpack.c.b16 %v1964, %v1956
    %v2149 = vpack.c.b16 %v1965, %v1957
    %v2150 = vpack.c.b16 %v1966, %v1958
    %v2151 = vpack.c.b16 %v1975, %v1967
    %v2152 = vpack.c.b16 %v1976, %v1968
    %v2153 = vpack.c.b16 %v1977, %v1969
    %v2154 = vpack.c.b16 %v1978, %v1970
    %v2155 = vpack.c.b16 %v1979, %v1971
    %v2156 = vpack.c.b16 %v1980, %v1972
    %v2157 = vpack.c.b16 %v1981, %v1973
    %v2158 = vpack.c.b16 %v1982, %v1974
    %v2159 = vpack.c.b16 %v1991, %v1983
    %v2160 = vpack.c.b16 %v1992, %v1984
    %v2161 = vpack.c.b16 %v1993, %v1985
    %v2162 = vpack.c.b16 %v1994, %v1986
    %v2163 = vpack.c.b16 %v1995, %v1987
    %v2164 = vpack.c.b16 %v1996, %v1988
    %v2165 = vpack.c.b16 %v1997, %v1989
    %v2166 = vpack.c.b16 %v1998, %v1990
    %v2167 = vpack.c.b16 %v2007, %v1999
    %v2168 = vpack.c.b16 %v2008, %v2000
    %v2169 = vpack.c.b16 %v2009, %v2001
    %v2170 = vpack.c.b16 %v2010, %v2002
    %v2171 = vpack.c.b16 %v2011, %v2003
    %v2172 = vpack.c.b16 %v2012, %v2004
    %v2173 = vpack.c.b16 %v2013, %v2005
    %v2174 = vpack.c.b16 %v2014, %v2006
    %v2175 = vpack.c.b16 %v2023, %v2015
    %v2176 = vpack.c.b16 %v2024, %v2016
    %v2177 = vpack.c.b16 %v2025, %v2017
    %v2178 = vpack.c.b16 %v2026, %v2018
    %v2179 = vpack.c.b16 %v2027, %v2019
    %v2180 = vpack.c.b16 %v2028, %v2020
    %v2181 = vpack.c.b16 %v2029, %v2021
    %v2182 = vpack.c.b16 %v2030, %v2022
    %v2183 = vpack.c.b16 %v2039, %v2031
    %v2184 = vpack.c.b16 %v2040, %v2032
    %v2185 = vpack.c.b16 %v2041, %v2033
    %v2186 = vpack.c.b16 %v2042, %v2034
    %v2187 = vpack.c.b16 %v2043, %v2035
    %v2188 = vpack.c.b16 %v2044, %v2036
    %v2189 = vpack.c.b16 %v2045, %v2037
    %v2190 = vpack.c.b16 %v2046, %v2038
    %v2191 = vpack.c.b16 %v2055, %v2047
    %v2192 = vpack.c.b16 %v2056, %v2048
    %v2193 = vpack.c.b16 %v2057, %v2049
    %v2194 = vpack.c.b16 %v2058, %v2050
    %v2195 = vpack.c.b16 %v2059, %v2051
    %v2196 = vpack.c.b16 %v2060, %v2052
    %v2197 = vpack.c.b16 %v2061, %v2053
    %v2198 = vpack.c.b16 %v2062, %v2054
    %v2199 = vpack.c.b16 %v2071, %v2063
    %v2200 = vpack.c.b16 %v2072, %v2064
    %v2201 = vpack.c.b16 %v2073, %v2065
    %v2202 = vpack.c.b16 %v2074, %v2066
    %v2203 = vpack.c.b16 %v2075, %v2067
    %v2204 = vpack.c.b16 %v2076, %v2068
    %v2205 = vpack.c.b16 %v2077, %v2069
    %v2206 = vpack.c.b16 %v2078, %v2070
    %2335 = vmatprep.subr.bf16.mxu0 %v2080
    %2336 = vmatpush1.bf16.msra.mxu0 %v2079
    %2337 = vmatprep.subr.bf16.mxu0 %v2088
    %2338 = vmatpush1.bf16.msra.mxu0 %v2087
    %2339 = vmatprep.subr.bf16.mxu0 %v2096
    %2340 = vmatpush1.bf16.msra.mxu0 %v2095
    %2341 = vmatprep.subr.bf16.mxu0 %v2104
    %2342 = vmatpush1.bf16.msra.mxu0 %v2103
    %2343 = vmatprep.subr.bf16.mxu0 %v2112
    %2344 = vmatpush1.bf16.msra.mxu0 %v2111
    %2345 = vmatprep.subr.bf16.mxu0 %v2120
    %2346 = vmatpush1.bf16.msra.mxu0 %v2119
    %2347 = vmatprep.subr.bf16.mxu0 %v2128
    %2348 = vmatpush1.bf16.msra.mxu0 %v2127
    %2349 = vmatprep.subr.bf16.mxu0 %v2136
    %2350 = vmatpush1.bf16.msra.mxu0 %v2135
    %2351 = vmatprep.subr.bf16.mxu0 %v2144
    %2352 = vmatpush1.bf16.msra.mxu0 %v2143
    %2353 = vmatprep.subr.bf16.mxu0 %v2152
    %2354 = vmatpush1.bf16.msra.mxu0 %v2151
    %2355 = vmatprep.subr.bf16.mxu0 %v2160
    %2356 = vmatpush1.bf16.msra.mxu0 %v2159
    %2357 = vmatprep.subr.bf16.mxu0 %v2168
    %2358 = vmatpush1.bf16.msra.mxu0 %v2167
    %2359 = vmatprep.subr.bf16.mxu0 %v2176
    %2360 = vmatpush1.bf16.msra.mxu0 %v2175
    %2361 = vmatprep.subr.bf16.mxu0 %v2184
    %2362 = vmatpush1.bf16.msra.mxu0 %v2183
    %2363 = vmatprep.subr.bf16.mxu0 %v2192
    %2364 = vmatpush1.bf16.msra.mxu0 %v2191
    %2365 = vmatprep.subr.bf16.mxu0 %v2200
    %2366 = vmatpush1.bf16.msra.mxu0 %v2199
    %2367 = vmatprep.mubr.bf16.mxu0 %v1524
    %2368 = vmatmul.mubr.bf16.gmra.mrb[0].mxu0 %v1523
    %v2369 = vpop.f32.mrb[0].mxu0
    %v2370 = vadd.f32 %v1658, %v2369
    %v2371 = vpop.f32.mrb[0].mxu0
    %v2372 = vadd.f32 %v1662, %v2371
    %v2373 = vpop.f32.mrb[0].mxu0
    %v2374 = vpop.f32.mrb[0].mxu0
    %2375 = vdwg.mxu0
    %2376 = vmatprep.subr.bf16.mxu0 %v2082
    %2377 = vmatpush1.bf16.msra.mxu0 %v2081
    %2378 = vmatprep.subr.bf16.mxu0 %v2090
    %2379 = vmatpush1.bf16.msra.mxu0 %v2089
    %2380 = vmatprep.subr.bf16.mxu0 %v2098
    %2381 = vmatpush1.bf16.msra.mxu0 %v2097
    %2382 = vmatprep.subr.bf16.mxu0 %v2106
    %2383 = vmatpush1.bf16.msra.mxu0 %v2105
    %2384 = vmatprep.subr.bf16.mxu0 %v2114
    %2385 = vmatpush1.bf16.msra.mxu0 %v2113
    %2386 = vmatprep.subr.bf16.mxu0 %v2122
    %2387 = vmatpush1.bf16.msra.mxu0 %v2121
    %2388 = vmatprep.subr.bf16.mxu0 %v2130
    %2389 = vmatpush1.bf16.msra.mxu0 %v2129
    %2390 = vmatprep.subr.bf16.mxu0 %v2138
    %2391 = vmatpush1.bf16.msra.mxu0 %v2137
    %2392 = vmatprep.subr.bf16.mxu0 %v2146
    %2393 = vmatpush1.bf16.msra.mxu0 %v2145
    %2394 = vmatprep.subr.bf16.mxu0 %v2154
    %2395 = vmatpush1.bf16.msra.mxu0 %v2153
    %2396 = vmatprep.subr.bf16.mxu0 %v2162
    %2397 = vmatpush1.bf16.msra.mxu0 %v2161
    %2398 = vmatprep.subr.bf16.mxu0 %v2170
    %2399 = vmatpush1.bf16.msra.mxu0 %v2169
    %2400 = vmatprep.subr.bf16.mxu0 %v2178
    %2401 = vmatpush1.bf16.msra.mxu0 %v2177
    %2402 = vmatprep.subr.bf16.mxu0 %v2186
    %2403 = vmatpush1.bf16.msra.mxu0 %v2185
    %2404 = vmatprep.subr.bf16.mxu0 %v2194
    %2405 = vmatpush1.bf16.msra.mxu0 %v2193
    %2406 = vmatprep.subr.bf16.mxu0 %v2202
    %2407 = vmatpush1.bf16.msra.mxu0 %v2201
    %2408 = vmatprep.mubr.bf16.mxu0 %v1524
    %2409 = vmatmul.mubr.bf16.gmra.mrb[0].mxu0 %v1523
    %v2410 = vpop.f32.mrb[0].mxu0
    %v2411 = vadd.f32 %v1666, %v2410
    %v2412 = vpop.f32.mrb[0].mxu0
    %v2413 = vadd.f32 %v1670, %v2412
    %v2414 = vpop.f32.mrb[0].mxu0
    %v2415 = vpop.f32.mrb[0].mxu0
    %2416 = vdwg.mxu0
    %2417 = vmatprep.subr.bf16.mxu0 %v2084
    %2418 = vmatpush1.bf16.msra.mxu0 %v2083
    %2419 = vmatprep.subr.bf16.mxu0 %v2092
    %2420 = vmatpush1.bf16.msra.mxu0 %v2091
    %2421 = vmatprep.subr.bf16.mxu0 %v2100
    %2422 = vmatpush1.bf16.msra.mxu0 %v2099
    %2423 = vmatprep.subr.bf16.mxu0 %v2108
    %2424 = vmatpush1.bf16.msra.mxu0 %v2107
    %2425 = vmatprep.subr.bf16.mxu0 %v2116
    %2426 = vmatpush1.bf16.msra.mxu0 %v2115
    %2427 = vmatprep.subr.bf16.mxu0 %v2124
    %2428 = vmatpush1.bf16.msra.mxu0 %v2123
    %2429 = vmatprep.subr.bf16.mxu0 %v2132
    %2430 = vmatpush1.bf16.msra.mxu0 %v2131
    %2431 = vmatprep.subr.bf16.mxu0 %v2140
    %2432 = vmatpush1.bf16.msra.mxu0 %v2139
    %2433 = vmatprep.subr.bf16.mxu0 %v2148
    %2434 = vmatpush1.bf16.msra.mxu0 %v2147
    %2435 = vmatprep.subr.bf16.mxu0 %v2156
    %2436 = vmatpush1.bf16.msra.mxu0 %v2155
    %2437 = vmatprep.subr.bf16.mxu0 %v2164
    %2438 = vmatpush1.bf16.msra.mxu0 %v2163
    %2439 = vmatprep.subr.bf16.mxu0 %v2172
    %2440 = vmatpush1.bf16.msra.mxu0 %v2171
    %2441 = vmatprep.subr.bf16.mxu0 %v2180
    %2442 = vmatpush1.bf16.msra.mxu0 %v2179
    %2443 = vmatprep.subr.bf16.mxu0 %v2188
    %2444 = vmatpush1.bf16.msra.mxu0 %v2187
    %2445 = vmatprep.subr.bf16.mxu0 %v2196
    %2446 = vmatpush1.bf16.msra.mxu0 %v2195
    %2447 = vmatprep.subr.bf16.mxu0 %v2204
    %2448 = vmatpush1.bf16.msra.mxu0 %v2203
    %2449 = vmatprep.mubr.bf16.mxu0 %v1524
    %2450 = vmatmul.mubr.bf16.gmra.mrb[0].mxu0 %v1523
    %v2451 = vpop.f32.mrb[0].mxu0
    %v2452 = vadd.f32 %v1674, %v2451
    %v2453 = vpop.f32.mrb[0].mxu0
    %v2454 = vadd.f32 %v1678, %v2453
    %v2455 = vpop.f32.mrb[0].mxu0
    %v2456 = vpop.f32.mrb[0].mxu0
    %2457 = vdwg.mxu0
    %2458 = vmatprep.subr.bf16.mxu0 %v2086
    %2459 = vmatpush1.bf16.msra.mxu0 %v2085
    %2460 = vmatprep.subr.bf16.mxu0 %v2094
    %2461 = vmatpush1.bf16.msra.mxu0 %v2093
    %2462 = vmatprep.subr.bf16.mxu0 %v2102
    %2463 = vmatpush1.bf16.msra.mxu0 %v2101
    %2464 = vmatprep.subr.bf16.mxu0 %v2110
    %2465 = vmatpush1.bf16.msra.mxu0 %v2109
    %2466 = vmatprep.subr.bf16.mxu0 %v2118
    %2467 = vmatpush1.bf16.msra.mxu0 %v2117
    %2468 = vmatprep.subr.bf16.mxu0 %v2126
    %2469 = vmatpush1.bf16.msra.mxu0 %v2125
    %2470 = vmatprep.subr.bf16.mxu0 %v2134
    %2471 = vmatpush1.bf16.msra.mxu0 %v2133
    %2472 = vmatprep.subr.bf16.mxu0 %v2142
    %2473 = vmatpush1.bf16.msra.mxu0 %v2141
    %2474 = vmatprep.subr.bf16.mxu0 %v2150
    %2475 = vmatpush1.bf16.msra.mxu0 %v2149
    %2476 = vmatprep.subr.bf16.mxu0 %v2158
    %2477 = vmatpush1.bf16.msra.mxu0 %v2157
    %2478 = vmatprep.subr.bf16.mxu0 %v2166
    %2479 = vmatpush1.bf16.msra.mxu0 %v2165
    %2480 = vmatprep.subr.bf16.mxu0 %v2174
    %2481 = vmatpush1.bf16.msra.mxu0 %v2173
    %2482 = vmatprep.subr.bf16.mxu0 %v2182
    %2483 = vmatpush1.bf16.msra.mxu0 %v2181
    %2484 = vmatprep.subr.bf16.mxu0 %v2190
    %2485 = vmatpush1.bf16.msra.mxu0 %v2189
    %2486 = vmatprep.subr.bf16.mxu0 %v2198
    %2487 = vmatpush1.bf16.msra.mxu0 %v2197
    %2488 = vmatprep.subr.bf16.mxu0 %v2206
    %2489 = vmatpush1.bf16.msra.mxu0 %v2205
    %2490 = vmatprep.mubr.bf16.mxu0 %v1524
    %2491 = vmatmul.mubr.bf16.gmra.mrb[0].mxu0 %v1523
    %v2492 = vpop.f32.mrb[0].mxu0
    %v2493 = vadd.f32 %v1682, %v2492
    %v2494 = vpop.f32.mrb[0].mxu0
    %v2495 = vadd.f32 %v1686, %v2494
    %v2496 = vpop.f32.mrb[0].mxu0
    %v2497 = vpop.f32.mrb[0].mxu0
    %2498 = vdwg.mxu0
    %v2499 = vpack.c.bf16 %v2370, %v2370
    %v2500 = vpack.c.bf16 %v2372, %v2372
    %v2501 = vpack.c.bf16 %v2411, %v2411
    %v2502 = vpack.c.bf16 %v2413, %v2413
    %v2503 = vpack.c.bf16 %v2452, %v2452
    %v2504 = vpack.c.bf16 %v2454, %v2454
    %v2505 = vpack.c.bf16 %v2493, %v2493
    %v2506 = vpack.c.bf16 %v2495, %v2495
    %v2515 = vunpack.c.l.b16 %v2499
    %v2516 = vunpack.c.l.b16 %v2500
    %v2517 = vunpack.c.l.b16 %v2501
    %v2518 = vunpack.c.l.b16 %v2502
    %v2519 = vunpack.c.l.b16 %v2503
    %v2520 = vunpack.c.l.b16 %v2504
    %v2521 = vunpack.c.l.b16 %v2505
    %v2522 = vunpack.c.l.b16 %v2506
    %v2523 = vpack.c.b16 %v2516, %v2515
    %v2524 = vpack.c.b16 %v2518, %v2517
    %v2525 = vpack.c.b16 %v2520, %v2519
    %v2526 = vpack.c.b16 %v2522, %v2521
    %2531 = vst [vmem:[#allocation2] sm:$0xff] %v2523
    %2532 = vst [vmem:[#allocation2 + $0x8] sm:$0xff] %v2524
    %2533 = vst [vmem:[#allocation2 + $0x10] sm:$0xff] %v2525
    %vm2534 = vcmask 1043456
    %vm2535 = vcmask 293892
    %vm2536 = vmor %vm2535, %vm2534
    %2537 = vst.msk [vmem:[#allocation2 + $0x18] sm:$0xff] %vm2536, %v2526
    // Predicated region
    $region54: #{mordred_ae_forward.1} parent=1 // pred_check
      _
    $region55: #{mordred_ae_forward.1} parent=1 // pred_check_branch
      %2539 = sbr.rel (0) target = $region57
    $region56: #{mordred_ae_forward.1} parent=1 // pred_region
      %s2541 = ssub.s32 512, 512
      %2542 = vsyncadd [#allocation3], %s2541
      %s2544 = sshll.u32 [#allocation2], 4
      %s2545 = int_to_ptr.vmem [resolvable:$true] %s2544
      %2547 = dma.vmem_to_hbm [thread:$0]  %s2545, 512, %s13, [#allocation3]
    $region57: #{mordred_ae_forward.1} parent=1 // pred_fallthru
      _
    // Predicated region
    $region58: #{mordred_ae_forward.1} parent=1 // pred_check
      _
    $region59: #{mordred_ae_forward.1} parent=1 // pred_check_branch
      %2549 = sbr.rel (0) target = $region61
    $region60: #{mordred_ae_forward.1} parent=1 // pred_region
      %2550 = dma.done [#allocation3], 512
    $region61: #{mordred_ae_forward.1} parent=1 // pred_fallthru
      _
    %2551 = vsyncpa [#allocation3], 1

</llo_original>
